<compile_context>
chip_gen: v6e
topology: v6e:2x2x1
jax: 0.10.0
libtpu: 0.0.40
codegen_flags: <defaults>
</compile_context>

<pallas_src>
import functools

import jax
import jax.numpy as jnp
from jax.experimental import pallas as pl
from jax.experimental.pallas import tpu as pltpu


def _round_up(v, m):
    return -(-v // m) * m


# ----------------------------------------------------------------------------
# Fused kernel (one batch tile): pad -> per-tap conv matmul -> bias ->
# (leaky_)relu -> vectorized masked max-pool -> linear.
# ----------------------------------------------------------------------------
def _fused_cnn_kernel(x_ref, w_ref, b_ref, mask_ref, lw_ref, lb_ref, o_ref, xp_ref,
                      *, max_w, pad_left, t_out_pad, leaky):
    # x_ref:    (b_tile, T, D)                f32 input tile
    # w_ref:    (max_w, D, f_pad)             stacked conv weights (tap-major), f32/bf16
    # b_ref:    (1, f_pad)                    stacked conv bias, f32
    # mask_ref: (b_tile, t_out_pad, f_pad)    int8: 1 = exclude from max-pool
    # lw_ref:   (f_pad, out_pad)              linear weight (transposed), f32/bf16
    # lb_ref:   (1, out_pad)                  linear bias, f32
    # o_ref:    (b_tile, out_pad)             f32 logits (lane-dense store)
    # xp_ref:   (b_tile, t_padded, D)         f32 scratch for time-zero-padded x
    b_t, t_in, d = x_ref.shape
    f_pad = w_ref.shape[2]
    t_padded = xp_ref.shape[1]
    pad_right = t_padded - pad_left - t_in

    # ---- time zero-padding: touch only the pad rows, then copy x ----
    if pad_left > 0:
        xp_ref[:, :pad_left, :] = jnp.zeros((b_t, pad_left, d), xp_ref.dtype)
    if pad_right > 0:
        xp_ref[:, pad_left + t_in:, :] = jnp.zeros((b_t, pad_right, d), xp_ref.dtype)
    xp_ref[:, pad_left:pad_left + t_in, :] = x_ref[...]
    xp = xp_ref[...]

    # ---- conv as per-tap matmul accumulation (no materialized im2col) ----
    # NOTE: at production sizes D >= 128 keeps each per-tap matmul MXU-efficient.
    m = b_t * t_out_pad
    acc = jnp.zeros((m, f_pad), jnp.float32)
    for tap in range(max_w):                                   # static unroll
        lhs = xp[:, tap:tap + t_out_pad, :].reshape(m, d).astype(w_ref.dtype)
        acc = acc + jnp.dot(lhs, w_ref[tap], preferred_element_type=jnp.float32)
    act = acc + b_ref[...]                                     # (1, f_pad) broadcast

    if leaky:
        act = jnp.where(act > 0, act, 0.01 * act)              # F.leaky_relu slope
    else:
        act = jnp.maximum(act, 0.0)

    # ---- vectorized masked max-pool over time (single where + single reduce) ----
    # TODO(synk): a row whose every position of a branch is padding-masked pools to
    # -3e38 here instead of PyTorch's (global_min - 1); unreachable when pad=True.
    neg = jnp.float32(-3.0e38)
    act3 = act.reshape(b_t, t_out_pad, f_pad)
    act3 = jnp.where(mask_ref[...] != 0, neg, act3)
    pooled = jnp.max(act3, axis=1)                             # (b_t, f_pad)

    # TODO(synk): nn.Dropout is a no-op at inference; training dropout not implemented.

    # ---- fused final linear (128-lane-dense output store) ----
    o_ref[...] = (jnp.dot(pooled.astype(lw_ref.dtype), lw_ref[...],
                          preferred_element_type=jnp.float32) + lb_ref[...])


# ----------------------------------------------------------------------------
# One-time parameter packing: stack all conv branches into one tap-major weight,
# zero-pad feature / output dims up to a lane multiple (128).
# ----------------------------------------------------------------------------
def pack_params(params, *, filter_sizes, pad, input_size, n_filters,
                compute_dtype=jnp.float32, lane=128):
    D, F = input_size, n_filters
    max_w = max(filter_sizes)
    pad_left = max_w - 1 if pad else 0
    n_branch = len(filter_sizes)
    f_total = n_branch * F
    f_pad = _round_up(f_total, lane)
    out_size = params["lin_w"].shape[0]
    out_pad = _round_up(out_size, lane)

    w_stacked = jnp.zeros((max_w, D, f_pad), jnp.float32)
    for i, w in enumerate(filter_sizes):
        conv_pad = w - 1 if pad else 0
        off = pad_left - conv_pad
        # torch Conv2d weight layout (F, 1, w, D) -> (w, D, F)
        wi = jnp.transpose(jnp.asarray(params["conv_w"][i])[:, 0, :, :], (1, 2, 0))
        w_stacked = w_stacked.at[off:off + w, :, i * F:(i + 1) * F].set(wi)

    conv_b = jnp.zeros((1, f_pad), jnp.float32)
    conv_b = conv_b.at[0, :f_total].set(
        jnp.concatenate([jnp.asarray(params["conv_b"][i]) for i in range(n_branch)]))

    lin_w = jnp.zeros((f_pad, out_pad), jnp.float32)
    lin_w = lin_w.at[:f_total, :out_size].set(jnp.asarray(params["lin_w"]).T)
    lin_b = jnp.zeros((1, out_pad), jnp.float32)
    lin_b = lin_b.at[0, :out_size].set(jnp.asarray(params["lin_b"]))

    return {
        "conv_w": w_stacked.astype(compute_dtype),   # MXU inputs (bf16 on v6e/v7x)
        "conv_b": conv_b,                            # epilogue stays f32
        "lin_w": lin_w.astype(compute_dtype),
        "lin_b": lin_b,
    }


def _pool_mask(padding_mask, *, filter_sizes, n_filters, pad, t_out_pad, f_total_pad):
    """(B, t_out_pad, f_total_pad) int8: 1 = exclude from max-pool, 0 = keep."""
    B, T = padding_mask.shape
    cols = []
    for w in filter_sizes:
        conv_pad = w - 1 if pad else 0
        t_out_i = T + 2 * conv_pad - w + 1
        pm = padding_mask
        if conv_pad > 0:
            pm = jnp.concatenate([jnp.zeros((B, conv_pad), dtype=bool), pm], axis=1)
        keep_len = min(t_out_i, t_out_pad)
        excl = pm[:, :keep_len]
        if t_out_pad > keep_len:   # positions past this branch's t_out: always exclude
            excl = jnp.concatenate(
                [excl, jnp.ones((B, t_out_pad - keep_len), dtype=bool)], axis=1)
        cols.append(jnp.repeat(excl[:, :, None], n_filters, axis=2))
    m = jnp.concatenate(cols, axis=2)                         # (B, t_out_pad, f_total)
    f_total = m.shape[2]
    if f_total_pad > f_total:      # padded (zero-weight) lanes: keep -> pooled = 0
        m = jnp.concatenate(
            [m, jnp.zeros((B, t_out_pad, f_total_pad - f_total), dtype=bool)], axis=2)
    return m.astype(jnp.int8)


# ----------------------------------------------------------------------------
# Full module forward (single fused pallas_call, batch-tiled "parallel" grid).
# ----------------------------------------------------------------------------
@functools.partial(jax.jit, static_argnames=("filter_sizes", "n_filters", "pad",
                                             "leaky", "output_size", "b_tile"))
def cnn_forward(x, padding_mask, packed, *, filter_sizes, n_filters, pad, leaky,
                output_size, b_tile=8):
    B, T, D = x.shape
    max_w = max(filter_sizes)
    min_w = min(filter_sizes)
    pad_left = max_w - 1 if pad else 0
    t_out = (T + max_w - 1) if pad else (T - min_w + 1)   # widest branch's t_out
    t_out_pad = _round_up(t_out, 8)                       # sublane-aligned matmul M
    t_padded = t_out_pad + max_w - 1                      # scratch rows needed
    f_pad = packed["conv_w"].shape[2]
    out_pad = packed["lin_w"].shape[1]

    b_tile = min(b_tile, B)
    if B % b_tile != 0:
        b_tile = B

    mask = _pool_mask(padding_mask, filter_sizes=filter_sizes, n_filters=n_filters,
                      pad=pad, t_out_pad=t_out_pad, f_total_pad=f_pad)

    kernel = functools.partial(_fused_cnn_kernel, max_w=max_w, pad_left=pad_left,
                               t_out_pad=t_out_pad, leaky=leaky)

    flops = 2 * B * t_out_pad * D * f_pad * max_w + 2 * B * f_pad * out_pad
    bytes_accessed = (x.size * x.dtype.itemsize
                      + sum(int(v.size) * v.dtype.itemsize for v in packed.values())
                      + mask.size + B * out_pad * 4)

    # Per-grid-step VMEM (x2 double-buffering on the batch-tiled operands):
    #   x: b_tile*T*D*4, mask: b_tile*t_out_pad*f_pad, out: b_tile*out_pad*4,
    #   scratch: b_tile*t_padded*D*4, plus weights once.  Re-derive b_tile for
    #   v7x's 64 MiB VMEM at production sizes (bf16 weights halve the constant part).
    out = pl.pallas_call(
        kernel,
        out_shape=jax.ShapeDtypeStruct((B, out_pad), jnp.float32),
        grid=(B // b_tile,),
        in_specs=[
            pl.BlockSpec((b_tile, T, D), lambda i: (i, 0, 0)),
            pl.BlockSpec(packed["conv_w"].shape, lambda i: (0, 0, 0)),
            pl.BlockSpec(packed["conv_b"].shape, lambda i: (0, 0)),
            pl.BlockSpec((b_tile, t_out_pad, f_pad), lambda i: (i, 0, 0)),
            pl.BlockSpec(packed["lin_w"].shape, lambda i: (0, 0)),
            pl.BlockSpec(packed["lin_b"].shape, lambda i: (0, 0)),
        ],
        out_specs=pl.BlockSpec((b_tile, out_pad), lambda i: (i, 0)),
        scratch_shapes=[pltpu.VMEM((b_tile, t_padded, D), jnp.float32)],
        compiler_params=pltpu.CompilerParams(dimension_semantics=("parallel",)),
        cost_estimate=pl.CostEstimate(flops=flops, transcendentals=0,
                                      bytes_accessed=bytes_accessed),
    )(x, packed["conv_w"], packed["conv_b"], mask, packed["lin_w"], packed["lin_b"])

    return out[:, :output_size]   # drop the lane-padding columns (cheap XLA slice)


# ----------------------------------------------------------------------------
# Pure-JAX reference (for correctness check only) -- mirrors PyTorch exactly.
# ----------------------------------------------------------------------------
def cnn_reference(x, padding_mask, params, *, filter_sizes, pad, leaky):
    B, T, D = x.shape
    feats = []
    for i, w in enumerate(filter_sizes):
        cw, cb = params["conv_w"][i], params["conv_b"][i]
        conv_pad = w - 1 if pad else 0
        t_out = T + 2 * conv_pad - w + 1
        xp = jnp.pad(x, ((0, 0), (conv_pad, conv_pad), (0, 0)))
        out = jnp.zeros((B, t_out, cw.shape[0]), jnp.float32)
        for dw in range(w):
            out = out + jnp.einsum("btd,fd->btf", xp[:, dw:dw + t_out, :], cw[:, 0, dw, :])
        out = out + cb[None, None, :]
        out = jnp.where(out > 0, out, 0.01 * out) if leaky else jnp.maximum(out, 0.0)
        if conv_pad > 0:
            pm = jnp.concatenate([jnp.zeros((B, conv_pad), bool), padding_mask], axis=1)
        else:
            pm = padding_mask
        m = pm[:, :t_out]
        low = jnp.min(out) - 1.0
        out = jnp.where(m[:, :, None], low, out)
        feats.append(jnp.max(out, axis=1))
    f = jnp.concatenate(feats, axis=1)
    return f @ params["lin_w"].T + params["lin_b"]


if __name__ == "__main__":
    # Small shapes consistent with the module's forward pass.
    B, T, D = 16, 16, 32                 # batch, seq-len, input_size
    filter_sizes = (2, 3)
    n_filters = 8
    leaky = True
    pad = True
    output_size = 16
    b_tile = 8

    key = jax.random.PRNGKey(0)
    ks = jax.random.split(key, 8)
    x = jax.random.normal(ks[0], (B, T, D), jnp.float32)

    # padding_mask: True at padded (masked) positions, like the PyTorch usage.
    lengths = jnp.where(jnp.arange(B) % 2 == 0, T, T - 5)
    padding_mask = jnp.arange(T)[None, :] >= lengths[:, None]          # (B, T) bool

    # torch Conv2d weight layout: (F, 1, w, D); Linear weight: (out, in).
    params = {
        "conv_w": [0.1 * jax.random.normal(ks[1 + i], (n_filters, 1, w, D), jnp.float32)
                   for i, w in enumerate(filter_sizes)],
        "conv_b": [0.1 * jax.random.normal(ks[3 + i], (n_filters,), jnp.float32)
                   for i in range(len(filter_sizes))],
        "lin_w": 0.1 * jax.random.normal(
            ks[5], (output_size, len(filter_sizes) * n_filters), jnp.float32),
        "lin_b": 0.1 * jax.random.normal(ks[6], (output_size,), jnp.float32),
    }

    ref = cnn_reference(x, padding_mask, params,
                        filter_sizes=filter_sizes, pad=pad, leaky=leaky)

    # ---- f32 matmul inputs (tight correctness check) ----
    packed32 = pack_params(params, filter_sizes=filter_sizes, pad=pad, input_size=D,
                           n_filters=n_filters, compute_dtype=jnp.float32)
    logits = cnn_forward(x, padding_mask, packed32, filter_sizes=filter_sizes,
                         n_filters=n_filters, pad=pad, leaky=leaky,
                         output_size=output_size, b_tile=b_tile)
    logits = jax.block_until_ready(logits)
    assert logits.shape == (B, output_size)
    assert jnp.allclose(logits, ref, atol=5e-4, rtol=5e-4), "f32 mismatch vs reference"

    # ---- bf16 matmul inputs + f32 accumulate (production setting on v6e/v7x) ----
    packed16 = pack_params(params, filter_sizes=filter_sizes, pad=pad, input_size=D,
                           n_filters=n_filters, compute_dtype=jnp.bfloat16)
    logits16 = cnn_forward(x, padding_mask, packed16, filter_sizes=filter_sizes,
                           n_filters=n_filters, pad=pad, leaky=leaky,
                           output_size=output_size, b_tile=b_tile)
    logits16 = jax.block_until_ready(logits16)
    assert jnp.allclose(logits16, ref, atol=5e-2, rtol=5e-2), "bf16 mismatch vs reference"

    print("KERNEL_OK")
</pallas_src>

<mosaic_0001>
module attributes {stable_mosaic.version = 11 : i64} {
  func.func @_fused_cnn_kernel(%arg0: i32, %arg1: memref<8x16x32xf32, #tpu.memory_space<vmem>>, %arg2: memref<3x32x128xf32, #tpu.memory_space<vmem>>, %arg3: memref<1x128xf32, #tpu.memory_space<vmem>>, %arg4: memref<8x24x128xi8, #tpu.memory_space<vmem>>, %arg5: memref<128x128xf32, #tpu.memory_space<vmem>>, %arg6: memref<1x128xf32, #tpu.memory_space<vmem>>, %arg7: memref<8x128xf32, #tpu.memory_space<vmem>>, %arg8: memref<8x26x32xf32, #tpu.memory_space<vmem>>) attributes {dimension_semantics = [#tpu.dimension_semantics<parallel>], iteration_bounds = array<i64: 2>, scalar_prefetch = 0 : i64, scratch_operands = 1 : i64, tpu.core_type = #tpu.core_type<tc>, window_params = [{transform_indices = @transform_0, window_bounds = array<i64: 8, 16, 32>}, {pipeline_mode = #tpu.pipeline_mode<synchronous>, transform_indices = @transform_1, window_bounds = array<i64: 3, 32, 128>}, {pipeline_mode = #tpu.pipeline_mode<synchronous>, transform_indices = @transform_2, window_bounds = array<i64: 1, 128>}, {transform_indices = @transform_3, window_bounds = array<i64: 8, 24, 128>}, {pipeline_mode = #tpu.pipeline_mode<synchronous>, transform_indices = @transform_4, window_bounds = array<i64: 128, 128>}, {pipeline_mode = #tpu.pipeline_mode<synchronous>, transform_indices = @transform_5, window_bounds = array<i64: 1, 128>}, {transform_indices = @transform_6, window_bounds = array<i64: 8, 128>}]} {
    %cst = arith.constant 0.000000e+00 : f32
    %0 = vector.broadcast %cst : f32 to vector<8x2x32xf32>
    %c0 = arith.constant 0 : index
    %c0_0 = arith.constant 0 : index
    %c0_1 = arith.constant 0 : index
    %1 = vector.load %arg8[%c0, %c0_0, %c0_1] : memref<8x26x32xf32, #tpu.memory_space<vmem>>, vector<8x2x32xf32>
    tpu.vector_store %arg8[%c0, %c0_0, %c0_1], %0 {strides = array<i32>} : memref<8x26x32xf32, #tpu.memory_space<vmem>>, vector<8x2x32xf32>,
    %cst_2 = arith.constant 0.000000e+00 : f32
    %2 = vector.broadcast %cst_2 : f32 to vector<8x8x32xf32>
    %c0_3 = arith.constant 0 : index
    %c18 = arith.constant 18 : index
    %c0_4 = arith.constant 0 : index
    %3 = vector.load %arg8[%c0_3, %c18, %c0_4] : memref<8x26x32xf32, #tpu.memory_space<vmem>>, vector<8x8x32xf32>
    tpu.vector_store %arg8[%c0_3, %c18, %c0_4], %2 {strides = array<i32>} : memref<8x26x32xf32, #tpu.memory_space<vmem>>, vector<8x8x32xf32>,
    %c0_5 = arith.constant 0 : index
    %c0_6 = arith.constant 0 : index
    %c0_7 = arith.constant 0 : index
    %4 = vector.load %arg1[%c0_5, %c0_6, %c0_7] : memref<8x16x32xf32, #tpu.memory_space<vmem>>, vector<8x16x32xf32>
    %c0_8 = arith.constant 0 : index
    %c2 = arith.constant 2 : index
    %c0_9 = arith.constant 0 : index
    %5 = vector.load %arg8[%c0_8, %c2, %c0_9] : memref<8x26x32xf32, #tpu.memory_space<vmem>>, vector<8x16x32xf32>
    tpu.vector_store %arg8[%c0_8, %c2, %c0_9], %4 {strides = array<i32>} : memref<8x26x32xf32, #tpu.memory_space<vmem>>, vector<8x16x32xf32>,
    %c0_10 = arith.constant 0 : index
    %c0_11 = arith.constant 0 : index
    %c0_12 = arith.constant 0 : index
    %6 = vector.load %arg8[%c0_10, %c0_11, %c0_12] : memref<8x26x32xf32, #tpu.memory_space<vmem>>, vector<8x26x32xf32>
    %cst_13 = arith.constant 0.000000e+00 : f32
    %7 = vector.broadcast %cst_13 : f32 to vector<192x128xf32>
    %8 = vector.extract_strided_slice %6 {offsets = [0, 0, 0], sizes = [8, 24, 32], strides = [1, 1, 1]} : vector<8x26x32xf32> to vector<8x24x32xf32>
    %9 = vector.shape_cast %8 : vector<8x24x32xf32> to vector<192x32xf32>
    %c0_14 = arith.constant 0 : index
    %c0_15 = arith.constant 0 : index
    %c0_16 = arith.constant 0 : index
    %10 = vector.load %arg2[%c0_14, %c0_15, %c0_16] : memref<3x32x128xf32, #tpu.memory_space<vmem>>, vector<1x32x128xf32>
    %11 = vector.shape_cast %10 : vector<1x32x128xf32> to vector<32x128xf32>
    %cst_17 = arith.constant dense<0.000000e+00> : vector<192x128xf32>
    %12 = tpu.matmul %9, %11, %cst_17 {dimension_numbers = #tpu.dot_dimension_numbers<[1], [0], [0], [1], [0, 0, 1, 1], [], []>} : vector<192x32xf32>, vector<32x128xf32>, vector<192x128xf32> -> vector<192x128xf32>
    %13 = arith.addf %7, %12 : vector<192x128xf32>
    %14 = vector.extract_strided_slice %6 {offsets = [0, 1, 0], sizes = [8, 24, 32], strides = [1, 1, 1]} : vector<8x26x32xf32> to vector<8x24x32xf32>
    %15 = vector.shape_cast %14 : vector<8x24x32xf32> to vector<192x32xf32>
    %c1 = arith.constant 1 : index
    %c0_18 = arith.constant 0 : index
    %c0_19 = arith.constant 0 : index
    %16 = vector.load %arg2[%c1, %c0_18, %c0_19] : memref<3x32x128xf32, #tpu.memory_space<vmem>>, vector<1x32x128xf32>
    %17 = vector.shape_cast %16 : vector<1x32x128xf32> to vector<32x128xf32>
    %cst_20 = arith.constant dense<0.000000e+00> : vector<192x128xf32>
    %18 = tpu.matmul %15, %17, %cst_20 {dimension_numbers = #tpu.dot_dimension_numbers<[1], [0], [0], [1], [0, 0, 1, 1], [], []>} : vector<192x32xf32>, vector<32x128xf32>, vector<192x128xf32> -> vector<192x128xf32>
    %19 = arith.addf %13, %18 : vector<192x128xf32>
    %20 = vector.extract_strided_slice %6 {offsets = [0, 2, 0], sizes = [8, 24, 32], strides = [1, 1, 1]} : vector<8x26x32xf32> to vector<8x24x32xf32>
    %21 = vector.shape_cast %20 : vector<8x24x32xf32> to vector<192x32xf32>
    %c2_21 = arith.constant 2 : index
    %c0_22 = arith.constant 0 : index
    %c0_23 = arith.constant 0 : index
    %22 = vector.load %arg2[%c2_21, %c0_22, %c0_23] : memref<3x32x128xf32, #tpu.memory_space<vmem>>, vector<1x32x128xf32>
    %23 = vector.shape_cast %22 : vector<1x32x128xf32> to vector<32x128xf32>
    %cst_24 = arith.constant dense<0.000000e+00> : vector<192x128xf32>
    %24 = tpu.matmul %21, %23, %cst_24 {dimension_numbers = #tpu.dot_dimension_numbers<[1], [0], [0], [1], [0, 0, 1, 1], [], []>} : vector<192x32xf32>, vector<32x128xf32>, vector<192x128xf32> -> vector<192x128xf32>
    %25 = arith.addf %19, %24 : vector<192x128xf32>
    %c0_25 = arith.constant 0 : index
    %c0_26 = arith.constant 0 : index
    %26 = vector.load %arg3[%c0_25, %c0_26] : memref<1x128xf32, #tpu.memory_space<vmem>>, vector<1x128xf32>
    %27 = vector.broadcast %26 : vector<1x128xf32> to vector<192x128xf32>
    %28 = arith.addf %25, %27 : vector<192x128xf32>
    %cst_27 = arith.constant 0.000000e+00 : f32
    %29 = vector.broadcast %cst_27 : f32 to vector<192x128xf32>
    %30 = arith.cmpf ogt, %28, %29 : vector<192x128xf32>
    %cst_28 = arith.constant 0.00999999977 : f32
    %31 = vector.broadcast %cst_28 : f32 to vector<192x128xf32>
    %32 = arith.mulf %31, %28 : vector<192x128xf32>
    %33 = arith.select %30, %28, %32 : vector<192x128xi1>, vector<192x128xf32>
    %34 = vector.shape_cast %33 : vector<192x128xf32> to vector<8x24x128xf32>
    %c0_29 = arith.constant 0 : index
    %c0_30 = arith.constant 0 : index
    %c0_31 = arith.constant 0 : index
    %35 = vector.load %arg4[%c0_29, %c0_30, %c0_31] : memref<8x24x128xi8, #tpu.memory_space<vmem>>, vector<8x24x128xi8>
    %c0_i8 = arith.constant 0 : i8
    %36 = vector.broadcast %c0_i8 : i8 to vector<8x24x128xi8>
    %37 = arith.cmpi ne, %35, %36 : vector<8x24x128xi8>
    %cst_32 = arith.constant -3.000000e+38 : f32
    %38 = vector.broadcast %cst_32 : f32 to vector<8x24x128xf32>
    %39 = arith.select %37, %38, %34 : vector<8x24x128xi1>, vector<8x24x128xf32>
    %cst_33 = arith.constant dense<0xFF800000> : vector<8x128xf32>
    %40 = vector.multi_reduction <maximumf>, %39, %cst_33 [1] : vector<8x24x128xf32> to vector<8x128xf32>
    %c0_34 = arith.constant 0 : index
    %c0_35 = arith.constant 0 : index
    %41 = vector.load %arg5[%c0_34, %c0_35] : memref<128x128xf32, #tpu.memory_space<vmem>>, vector<128x128xf32>
    %cst_36 = arith.constant dense<0.000000e+00> : vector<8x128xf32>
    %42 = tpu.matmul %40, %41, %cst_36 {dimension_numbers = #tpu.dot_dimension_numbers<[1], [0], [0], [1], [0, 0, 1, 1], [], []>} : vector<8x128xf32>, vector<128x128xf32>, vector<8x128xf32> -> vector<8x128xf32>
    %c0_37 = arith.constant 0 : index
    %c0_38 = arith.constant 0 : index
    %43 = vector.load %arg6[%c0_37, %c0_38] : memref<1x128xf32, #tpu.memory_space<vmem>>, vector<1x128xf32>
    %44 = vector.broadcast %43 : vector<1x128xf32> to vector<8x128xf32>
    %45 = arith.addf %42, %44 : vector<8x128xf32>
    %c0_39 = arith.constant 0 : index
    %c0_40 = arith.constant 0 : index
    %46 = vector.load %arg7[%c0_39, %c0_40] : memref<8x128xf32, #tpu.memory_space<vmem>>, vector<8x128xf32>
    tpu.vector_store %arg7[%c0_39, %c0_40], %45 {strides = array<i32>} : memref<8x128xf32, #tpu.memory_space<vmem>>, vector<8x128xf32>,
    return
  }
  func.func @transform_0(%arg0: i32) -> (i32, i32, i32) {
    %c0_i32 = arith.constant 0 : i32
    %c0_i32_0 = arith.constant 0 : i32
    %c0_i32_1 = arith.constant 0 : i32
    return %arg0, %c0_i32, %c0_i32_0 : i32, i32, i32
  }
  func.func @transform_1(%arg0: i32) -> (i32, i32, i32) {
    %c0_i32 = arith.constant 0 : i32
    %c0_i32_0 = arith.constant 0 : i32
    %c0_i32_1 = arith.constant 0 : i32
    %c0_i32_2 = arith.constant 0 : i32
    return %c0_i32, %c0_i32_0, %c0_i32_1 : i32, i32, i32
  }
  func.func @transform_2(%arg0: i32) -> (i32, i32) {
    %c0_i32 = arith.constant 0 : i32
    %c0_i32_0 = arith.constant 0 : i32
    %c0_i32_1 = arith.constant 0 : i32
    return %c0_i32, %c0_i32_0 : i32, i32
  }
  func.func @transform_3(%arg0: i32) -> (i32, i32, i32) {
    %c0_i32 = arith.constant 0 : i32
    %c0_i32_0 = arith.constant 0 : i32
    %c0_i32_1 = arith.constant 0 : i32
    return %arg0, %c0_i32, %c0_i32_0 : i32, i32, i32
  }
  func.func @transform_4(%arg0: i32) -> (i32, i32) {
    %c0_i32 = arith.constant 0 : i32
    %c0_i32_0 = arith.constant 0 : i32
    %c0_i32_1 = arith.constant 0 : i32
    return %c0_i32, %c0_i32_0 : i32, i32
  }
  func.func @transform_5(%arg0: i32) -> (i32, i32) {
    %c0_i32 = arith.constant 0 : i32
    %c0_i32_0 = arith.constant 0 : i32
    %c0_i32_1 = arith.constant 0 : i32
    return %c0_i32, %c0_i32_0 : i32, i32
  }
  func.func @transform_6(%arg0: i32) -> (i32, i32) {
    %c0_i32 = arith.constant 0 : i32
    %c0_i32_0 = arith.constant 0 : i32
    return %arg0, %c0_i32 : i32, i32
  }
}

</mosaic_0001>

<llo_original>
// kernel: cnn_forward.1
$region0: #{cnn_forward.1}
  #allocation0 [shape = 'u32[]', space=smem, size = 0x4, offset = 0x4, fixed_abs, tag = 'smem constant byte address 0x4 - core index']
  #allocation1 [shape = 'u32[144,128]{1,0:T(1,128)}', space=vmem, size = 0x12000, scoped, tag = 'internal scratch']
  #allocation2 [shape = 'f32[8,26,32]{2,1,0:T(8,128)}', space=vmem, size = 0x20000, scoped, tag = 'scratch operand']
  %s0 = inlined_call_operand.vmem [shape: f32[16,16,32], index: 0, kind: input, shape index: {}]
  %s1 = inlined_call_operand.vmem [shape: f32[3,32,128], index: 1, kind: input, shape index: {}]
  %s2 = inlined_call_operand.vmem [shape: f32[1,128], index: 2, kind: input, shape index: {}]
  %s3 = inlined_call_operand.vmem [shape: s8[16,24,128], index: 3, kind: input, shape index: {}]
  %s4 = inlined_call_operand.vmem [shape: f32[128,128], index: 4, kind: input, shape index: {}]
  %s5 = inlined_call_operand.vmem [shape: f32[1,128], index: 5, kind: input, shape index: {}]
  %s6 = inlined_call_operand.hbm [shape: f32[16,128], index: 6, kind: output, shape index: {}]
  %s7 = sld [smem:[#allocation0]]
  $region57: #{cnn_forward.1} parent=0
    _
  %s9 = ssub.s32 1, %s7
  %s10 = scalar_select 0, %s9, %s7
  $region1: #{cnn_forward.1} parent=0
    #allocation3 [shape = 'u8[8192]{0}', space=vmem, size = 0x2000, scoped, tag = 'output window, operand 0']
    #allocation4 [shape = 's32[2]{0}', space=sflag, size = 0x8, scoped, tag = 'scoped memory for cnn_forward.1']
    %11 = vsyncpa [#allocation4], 0
    %s12 = scalar_lea.sflag [#allocation4], 1
    %13 = vsyncpa %s12, 0
    loop: start=0, step=1, limit=4
    $region2: #{cnn_forward.1} parent=1 // loop_pre_header
      _
    $region3: #{cnn_forward.1} parent=1 // loop_header
      %s15 = sphi 0, %s19
      %p16 = scmp.ge.s32.totalorder %s15, 4
      %s25 = sphi 0, %s27
      %s28 = sphi 0, %s25
      %s29 = sphi 0, %s28
      %s45 = sphi 0, %s29
      %s49 = sphi 0, %s49
      %s51 = sphi 0, %s49
      %s52 = sphi 0, %s51
      %s66 = sphi 0, %s52
      %s70 = sphi 0, %s70
      %s72 = sphi 0, %s70
      %s73 = sphi 0, %s72
      %s87 = sphi 0, %s73
      %s93 = sphi 0, %s95
      %s96 = sphi 0, %s93
      %s97 = sphi 0, %s96
      %s113 = sphi 0, %s97
      %s117 = sphi 0, %s117
      %s119 = sphi 0, %s117
      %s120 = sphi 0, %s119
      %s134 = sphi 0, %s120
      %s138 = sphi 0, %s138
      %s140 = sphi 0, %s138
      %s141 = sphi 0, %s140
      %s155 = sphi 0, %s141
      %s161 = sphi 0, %s163
      %s164 = sphi 0, %s161
      %s165 = sphi 0, %s164
      %s181 = sphi 0, %s165
    $region4: #{cnn_forward.1} parent=1 // loop_header_branch
      %18 = sbr.rel (%p16) target = $region8
    $region5: #{cnn_forward.1} parent=1 // loop_body
      %s20 = ssub.s32 %s15, 1
      %s21 = ssub.s32 %s15, 2
      %s22 = sadd.s32 %s15, 1
      %s23 = ssub.s32 %s15, %s22
      %p24 = scmp.eq.s32.totalorder %s23, 0
      %s26 = sadd.s32 %s25, 1
      %s27 = scalar_select %p24, %s25, %s26
      %p30 = pneg %p24
      %p31 = scmp.eq.s32.totalorder %s15, 1
      %p32 = por %p30, %p31
      %p33 = scmp.ne.s32.totalorder %s25, %s28
      %p34 = scmp.eq.s32.totalorder %s15, 0
      %p35 = por %p33, %p34
      %p36 = scmp.ne.s32.totalorder %s25, %s28
      %p37 = scmp.eq.s32.totalorder %s20, 1
      %p38 = por %p36, %p37
      %p39 = scmp.ne.s32.totalorder %s28, %s29
      %p40 = scmp.eq.s32.totalorder %s20, 0
      %p41 = por %p39, %p40
      %p42 = scmp.ne.s32.totalorder %s28, %s29
      %p43 = scmp.eq.s32.totalorder %s21, 1
      %p44 = por %p42, %p43
      %p46 = scmp.ne.s32.totalorder %s29, %s45
      %p47 = scmp.eq.s32.totalorder %s21, 0
      %p48 = por %p46, %p47
      %s50 = sadd.s32 %s49, 1
      %p53 = scmp.eq.s32.totalorder %s15, 1
      %p54 = scmp.ne.s32.totalorder %s49, %s51
      %p55 = scmp.eq.s32.totalorder %s15, 0
      %p56 = por %p54, %p55
      %p57 = scmp.ne.s32.totalorder %s49, %s51
      %p58 = scmp.eq.s32.totalorder %s20, 1
      %p59 = por %p57, %p58
      %p60 = scmp.ne.s32.totalorder %s51, %s52
      %p61 = scmp.eq.s32.totalorder %s20, 0
      %p62 = por %p60, %p61
      %p63 = scmp.ne.s32.totalorder %s51, %s52
      %p64 = scmp.eq.s32.totalorder %s21, 1
      %p65 = por %p63, %p64
      %p67 = scmp.ne.s32.totalorder %s52, %s66
      %p68 = scmp.eq.s32.totalorder %s21, 0
      %p69 = por %p67, %p68
      %s71 = sadd.s32 %s70, 1
      %p74 = scmp.eq.s32.totalorder %s15, 1
      %p75 = scmp.ne.s32.totalorder %s70, %s72
      %p76 = scmp.eq.s32.totalorder %s15, 0
      %p77 = por %p75, %p76
      %p78 = scmp.ne.s32.totalorder %s70, %s72
      %p79 = scmp.eq.s32.totalorder %s20, 1
      %p80 = por %p78, %p79
      %p81 = scmp.ne.s32.totalorder %s72, %s73
      %p82 = scmp.eq.s32.totalorder %s20, 0
      %p83 = por %p81, %p82
      %p84 = scmp.ne.s32.totalorder %s72, %s73
      %p85 = scmp.eq.s32.totalorder %s21, 1
      %p86 = por %p84, %p85
      %p88 = scmp.ne.s32.totalorder %s73, %s87
      %p89 = scmp.eq.s32.totalorder %s21, 0
      %p90 = por %p88, %p89
      %s91 = ssub.s32 %s15, %s22
      %p92 = scmp.eq.s32.totalorder %s91, 0
      %s94 = sadd.s32 %s93, 1
      %s95 = scalar_select %p92, %s93, %s94
      %p98 = pneg %p92
      %p99 = scmp.eq.s32.totalorder %s15, 1
      %p100 = por %p98, %p99
      %p101 = scmp.ne.s32.totalorder %s93, %s96
      %p102 = scmp.eq.s32.totalorder %s15, 0
      %p103 = por %p101, %p102
      %p104 = scmp.ne.s32.totalorder %s93, %s96
      %p105 = scmp.eq.s32.totalorder %s20, 1
      %p106 = por %p104, %p105
      %p107 = scmp.ne.s32.totalorder %s96, %s97
      %p108 = scmp.eq.s32.totalorder %s20, 0
      %p109 = por %p107, %p108
      %p110 = scmp.ne.s32.totalorder %s96, %s97
      %p111 = scmp.eq.s32.totalorder %s21, 1
      %p112 = por %p110, %p111
      %p114 = scmp.ne.s32.totalorder %s97, %s113
      %p115 = scmp.eq.s32.totalorder %s21, 0
      %p116 = por %p114, %p115
      %s118 = sadd.s32 %s117, 1
      %p121 = scmp.eq.s32.totalorder %s15, 1
      %p122 = scmp.ne.s32.totalorder %s117, %s119
      %p123 = scmp.eq.s32.totalorder %s15, 0
      %p124 = por %p122, %p123
      %p125 = scmp.ne.s32.totalorder %s117, %s119
      %p126 = scmp.eq.s32.totalorder %s20, 1
      %p127 = por %p125, %p126
      %p128 = scmp.ne.s32.totalorder %s119, %s120
      %p129 = scmp.eq.s32.totalorder %s20, 0
      %p130 = por %p128, %p129
      %p131 = scmp.ne.s32.totalorder %s119, %s120
      %p132 = scmp.eq.s32.totalorder %s21, 1
      %p133 = por %p131, %p132
      %p135 = scmp.ne.s32.totalorder %s120, %s134
      %p136 = scmp.eq.s32.totalorder %s21, 0
      %p137 = por %p135, %p136
      %s139 = sadd.s32 %s138, 1
      %p142 = scmp.eq.s32.totalorder %s15, 1
      %p143 = scmp.ne.s32.totalorder %s138, %s140
      %p144 = scmp.eq.s32.totalorder %s15, 0
      %p145 = por %p143, %p144
      %p146 = scmp.ne.s32.totalorder %s138, %s140
      %p147 = scmp.eq.s32.totalorder %s20, 1
      %p148 = por %p146, %p147
      %p149 = scmp.ne.s32.totalorder %s140, %s141
      %p150 = scmp.eq.s32.totalorder %s20, 0
      %p151 = por %p149, %p150
      %p152 = scmp.ne.s32.totalorder %s140, %s141
      %p153 = scmp.eq.s32.totalorder %s21, 1
      %p154 = por %p152, %p153
      %p156 = scmp.ne.s32.totalorder %s141, %s155
      %p157 = scmp.eq.s32.totalorder %s21, 0
      %p158 = por %p156, %p157
      %s159 = ssub.s32 %s15, %s22
      %p160 = scmp.eq.s32.totalorder %s159, 0
      %s162 = sadd.s32 %s161, 1
      %s163 = scalar_select %p160, %s161, %s162
      %p166 = pneg %p160
      %p167 = scmp.eq.s32.totalorder %s15, 1
      %p168 = por %p166, %p167
      %p169 = scmp.ne.s32.totalorder %s161, %s164
      %p170 = scmp.eq.s32.totalorder %s15, 0
      %p171 = por %p169, %p170
      %p172 = scmp.ne.s32.totalorder %s161, %s164
      %p173 = scmp.eq.s32.totalorder %s20, 1
      %p174 = por %p172, %p173
      %p175 = scmp.ne.s32.totalorder %s164, %s165
      %p176 = scmp.eq.s32.totalorder %s20, 0
      %p177 = por %p175, %p176
      %p178 = scmp.ne.s32.totalorder %s164, %s165
      %p179 = scmp.eq.s32.totalorder %s21, 1
      %p180 = por %p178, %p179
      %p182 = scmp.ne.s32.totalorder %s165, %s181
      %p183 = scmp.eq.s32.totalorder %s21, 0
      %p184 = por %p182, %p183
      %p185 = scmp.le.s32.totalorder 1, %s15
      %p186 = scmp.lt.s32.totalorder %s15, 3
      %p187 = pnand %p185, %p186
      %p188 = pneg %p187
      // Predicated region
      $region9: #{cnn_forward.1} parent=5 // pred_check
        _
      $region10: #{cnn_forward.1} parent=5 // pred_check_branch
        %190 = sbr.rel (%p187) target = $region12
      $region11: #{cnn_forward.1} parent=5 // pred_region
        %s191 = ssub.s32 %s15, 1
        // Predicated region
        $region13: #{cnn_forward.1} parent=11 // pred_check
          %p192 = pneg %p62
        $region14: #{cnn_forward.1} parent=11 // pred_check_branch
          %194 = sbr.rel (%p192) target = $region16
        $region15: #{cnn_forward.1} parent=11 // pred_region
          _
        $region16: #{cnn_forward.1} parent=11 // pred_fallthru
          _
        // Predicated region
        $region17: #{cnn_forward.1} parent=11 // pred_check
          %p195 = pneg %p83
        $region18: #{cnn_forward.1} parent=11 // pred_check_branch
          %197 = sbr.rel (%p195) target = $region20
        $region19: #{cnn_forward.1} parent=11 // pred_region
          _
        $region20: #{cnn_forward.1} parent=11 // pred_fallthru
          _
        // Predicated region
        $region21: #{cnn_forward.1} parent=11 // pred_check
          %p198 = pneg %p130
        $region22: #{cnn_forward.1} parent=11 // pred_check_branch
          %200 = sbr.rel (%p198) target = $region24
        $region23: #{cnn_forward.1} parent=11 // pred_region
          _
        $region24: #{cnn_forward.1} parent=11 // pred_fallthru
          _
        // Predicated region
        $region25: #{cnn_forward.1} parent=11 // pred_check
          %p201 = pneg %p151
        $region26: #{cnn_forward.1} parent=11 // pred_check_branch
          %203 = sbr.rel (%p201) target = $region28
        $region27: #{cnn_forward.1} parent=11 // pred_region
          _
        $region28: #{cnn_forward.1} parent=11 // pred_fallthru
          _
      $region12: #{cnn_forward.1} parent=5 // pred_fallthru
        _
      %p204 = scmp.lt.s32.totalorder %s15, 2
      // Predicated region
      $region29: #{cnn_forward.1} parent=5 // pred_check
        %p205 = pneg %p204
      $region30: #{cnn_forward.1} parent=5 // pred_check_branch
        %207 = sbr.rel (%p205) target = $region32
      $region31: #{cnn_forward.1} parent=5 // pred_region
        // Predicated region
        $region33: #{cnn_forward.1} parent=31 // pred_check
          %p208 = pneg %p35
        $region34: #{cnn_forward.1} parent=31 // pred_check_branch
          %210 = sbr.rel (%p208) target = $region36
        $region35: #{cnn_forward.1} parent=31 // pred_region
          %s211 = smul.u32 8, %s15
          %p212 = scmp.lt.s32.totalorder %s211, 15
          %s213 = scalar_select %p212, %s211, 15
          %s214 = smul.addr %s213, 2
          %s215 = smul.addr %s214, 8
          %s216 = scalar_lea.vmem %s0, %s215
          %s217 = smul.u32 8, %s15
        $region36: #{cnn_forward.1} parent=31 // pred_fallthru
          _
        // Predicated region
        $region37: #{cnn_forward.1} parent=31 // pred_check
          %p218 = pneg %p103
        $region38: #{cnn_forward.1} parent=31 // pred_check_branch
          %220 = sbr.rel (%p218) target = $region40
        $region39: #{cnn_forward.1} parent=31 // pred_region
          %s221 = smul.u32 8, %s15
          %p222 = scmp.lt.s32.totalorder %s221, 15
          %s223 = scalar_select %p222, %s221, 15
          %s224 = smul.addr %s223, 3
          %s225 = smul.addr %s224, 2
          %s226 = scalar_lea.vmem %s3, %s225
          %s227 = smul.u32 8, %s15
        $region40: #{cnn_forward.1} parent=31 // pred_fallthru
          _
      $region32: #{cnn_forward.1} parent=5 // pred_fallthru
        _
      %p228 = scmp.le.s32.totalorder 1, %s15
      %p229 = scmp.lt.s32.totalorder %s15, 3
      %p230 = pnand %p228, %p229
      %p231 = pneg %p230
      // Predicated region
      $region41: #{cnn_forward.1} parent=5 // pred_check
        _
      $region42: #{cnn_forward.1} parent=5 // pred_check_branch
        %233 = sbr.rel (%p230) target = $region44
      $region43: #{cnn_forward.1} parent=5 // pred_region
        %s234 = ssub.s32 %s15, 1
        %s235 = smul.u32 8, %s20
        %p236 = scmp.lt.s32.totalorder %s235, 15
        %s237 = scalar_select %p236, %s235, 15
        %s238 = smul.addr %s237, 2
        %s239 = smul.addr %s238, 8
        %s240 = scalar_lea.vmem %s0, %s239
        %p241 = pneg %p41
        %p242 = pneg %p38
        %p243 = pneg %p62
        %p244 = pneg %p59
        %p245 = pneg %p83
        %p246 = pneg %p80
        %s247 = smul.u32 8, %s20
        %p248 = scmp.lt.s32.totalorder %s247, 15
        %s249 = scalar_select %p248, %s247, 15
        %s250 = smul.addr %s249, 3
        %s251 = smul.addr %s250, 2
        %s252 = scalar_lea.vmem %s3, %s251
        %p253 = pneg %p109
        %p254 = pneg %p106
        %p255 = pneg %p130
        %p256 = pneg %p127
        %p257 = pneg %p151
        %p258 = pneg %p148
        %p259 = pneg %p177
        %p260 = pneg %p174
        %s261 = sand.u32 %s164, 1
        %s262 = scalar_lea.sflag [#allocation4], %s261
        %s263 = sand.u32 %s164, 1
        %s264 = smul.addr %s263, 8
        %s265 = scalar_lea.vmem [#allocation3], %s264
        %s266 = smul.u32 8, %s20
        %p267 = scmp.lt.s32.totalorder %s266, 15
        %s268 = scalar_select %p267, %s266, 15
        %s269 = smul.addr %s268, 2
        %s270 = smul.addr %s269, 8
        %s271 = scalar_lea.vmem %s0, %s270
        %s272 = smul.u32 8, %s20
        %s273 = smul.u32 8, %s20
        %p274 = scmp.lt.s32.totalorder %s273, 15
        %s275 = scalar_select %p274, %s273, 15
        %s276 = smul.addr %s275, 3
        %s277 = smul.addr %s276, 2
        %s278 = scalar_lea.vmem %s3, %s277
        %s279 = smul.u32 8, %s20
        %vm282 = vcmask 254976
        %283 = vst.msk [vmem:[#allocation2] sm:$0x3] %vm282, 0.0
        %284 = vst.msk [vmem:[#allocation2 + $0x20] sm:$0x3] %vm282, 0.0
        %285 = vst.msk [vmem:[#allocation2 + $0x40] sm:$0x3] %vm282, 0.0
        %286 = vst.msk [vmem:[#allocation2 + $0x60] sm:$0x3] %vm282, 0.0
        %287 = vst.msk [vmem:[#allocation2 + $0x80] sm:$0x3] %vm282, 0.0
        %288 = vst.msk [vmem:[#allocation2 + $0xa0] sm:$0x3] %vm282, 0.0
        %289 = vst.msk [vmem:[#allocation2 + $0xc0] sm:$0x3] %vm282, 0.0
        %290 = vst.msk [vmem:[#allocation2 + $0xe0] sm:$0x3] %vm282, 0.0
        %vm291 = vcmask 261120
        %292 = vst.msk [vmem:[#allocation2 + $0x12] sm:$0xff] %vm291, 0.0
        %293 = vst.msk [vmem:[#allocation2 + $0x32] sm:$0xff] %vm291, 0.0
        %294 = vst.msk [vmem:[#allocation2 + $0x52] sm:$0xff] %vm291, 0.0
        %295 = vst.msk [vmem:[#allocation2 + $0x72] sm:$0xff] %vm291, 0.0
        %296 = vst.msk [vmem:[#allocation2 + $0x92] sm:$0xff] %vm291, 0.0
        %297 = vst.msk [vmem:[#allocation2 + $0xb2] sm:$0xff] %vm291, 0.0
        %298 = vst.msk [vmem:[#allocation2 + $0xd2] sm:$0xff] %vm291, 0.0
        %299 = vst.msk [vmem:[#allocation2 + $0xf2] sm:$0xff] %vm291, 0.0
        %v300 = vld [vmem:[%s271] sm:$0xff]
        %v301 = vld [vmem:[%s271 + $0x8] sm:$0xff]
        %v302 = vld [vmem:[%s271 + $0x10] sm:$0xff]
        %v303 = vld [vmem:[%s271 + $0x18] sm:$0xff]
        %v304 = vld [vmem:[%s271 + $0x20] sm:$0xff]
        %v305 = vld [vmem:[%s271 + $0x28] sm:$0xff]
        %v306 = vld [vmem:[%s271 + $0x30] sm:$0xff]
        %v307 = vld [vmem:[%s271 + $0x38] sm:$0xff]
        %v308 = vld [vmem:[%s271 + $0x40] sm:$0xff]
        %v309 = vld [vmem:[%s271 + $0x48] sm:$0xff]
        %v310 = vld [vmem:[%s271 + $0x50] sm:$0xff]
        %v311 = vld [vmem:[%s271 + $0x58] sm:$0xff]
        %v312 = vld [vmem:[%s271 + $0x60] sm:$0xff]
        %v313 = vld [vmem:[%s271 + $0x68] sm:$0xff]
        %v314 = vld [vmem:[%s271 + $0x70] sm:$0xff]
        %v315 = vld [vmem:[%s271 + $0x78] sm:$0xff]
        %316 = vst.msk [vmem:[#allocation2 + $0x2] sm:$0xff] %vm291, %v300
        %317 = vst.msk [vmem:[#allocation2 + $0xa] sm:$0xff] %vm291, %v301
        %318 = vst.msk [vmem:[#allocation2 + $0x22] sm:$0xff] %vm291, %v302
        %319 = vst.msk [vmem:[#allocation2 + $0x2a] sm:$0xff] %vm291, %v303
        %320 = vst.msk [vmem:[#allocation2 + $0x42] sm:$0xff] %vm291, %v304
        %321 = vst.msk [vmem:[#allocation2 + $0x4a] sm:$0xff] %vm291, %v305
        %322 = vst.msk [vmem:[#allocation2 + $0x62] sm:$0xff] %vm291, %v306
        %323 = vst.msk [vmem:[#allocation2 + $0x6a] sm:$0xff] %vm291, %v307
        %324 = vst.msk [vmem:[#allocation2 + $0x82] sm:$0xff] %vm291, %v308
        %325 = vst.msk [vmem:[#allocation2 + $0x8a] sm:$0xff] %vm291, %v309
        %326 = vst.msk [vmem:[#allocation2 + $0xa2] sm:$0xff] %vm291, %v310
        %327 = vst.msk [vmem:[#allocation2 + $0xaa] sm:$0xff] %vm291, %v311
        %328 = vst.msk [vmem:[#allocation2 + $0xc2] sm:$0xff] %vm291, %v312
        %329 = vst.msk [vmem:[#allocation2 + $0xca] sm:$0xff] %vm291, %v313
        %330 = vst.msk [vmem:[#allocation2 + $0xe2] sm:$0xff] %vm291, %v314
        %331 = vst.msk [vmem:[#allocation2 + $0xea] sm:$0xff] %vm291, %v315
        %v332 = vld [vmem:[#allocation2] sm:$0xff]
        %v333 = vld [vmem:[#allocation2 + $0x8] sm:$0xff]
        %v334 = vld [vmem:[#allocation2 + $0x10] sm:$0xff]
        %v335 = vld [vmem:[#allocation2 + $0x18] sm:$0x3]
        %v336 = vld [vmem:[#allocation2 + $0x20] sm:$0xff]
        %v337 = vld [vmem:[#allocation2 + $0x28] sm:$0xff]
        %v338 = vld [vmem:[#allocation2 + $0x30] sm:$0xff]
        %v339 = vld [vmem:[#allocation2 + $0x38] sm:$0x3]
        %v340 = vld [vmem:[#allocation2 + $0x40] sm:$0xff]
        %v341 = vld [vmem:[#allocation2 + $0x48] sm:$0xff]
        %v342 = vld [vmem:[#allocation2 + $0x50] sm:$0xff]
        %v343 = vld [vmem:[#allocation2 + $0x58] sm:$0x3]
        %v344 = vld [vmem:[#allocation2 + $0x60] sm:$0xff]
        %v345 = vld [vmem:[#allocation2 + $0x68] sm:$0xff]
        %v346 = vld [vmem:[#allocation2 + $0x70] sm:$0xff]
        %v347 = vld [vmem:[#allocation2 + $0x78] sm:$0x3]
        %v348 = vld [vmem:[#allocation2 + $0x80] sm:$0xff]
        %v349 = vld [vmem:[#allocation2 + $0x88] sm:$0xff]
        %v350 = vld [vmem:[#allocation2 + $0x90] sm:$0xff]
        %v351 = vld [vmem:[#allocation2 + $0x98] sm:$0x3]
        %v352 = vld [vmem:[#allocation2 + $0xa0] sm:$0xff]
        %v353 = vld [vmem:[#allocation2 + $0xa8] sm:$0xff]
        %v354 = vld [vmem:[#allocation2 + $0xb0] sm:$0xff]
        %v355 = vld [vmem:[#allocation2 + $0xb8] sm:$0x3]
        %v356 = vld [vmem:[#allocation2 + $0xc0] sm:$0xff]
        %v357 = vld [vmem:[#allocation2 + $0xc8] sm:$0xff]
        %v358 = vld [vmem:[#allocation2 + $0xd0] sm:$0xff]
        %v359 = vld [vmem:[#allocation2 + $0xd8] sm:$0x3]
        %v360 = vld [vmem:[#allocation2 + $0xe0] sm:$0xff]
        %v361 = vld [vmem:[#allocation2 + $0xe8] sm:$0xff]
        %v362 = vld [vmem:[#allocation2 + $0xf0] sm:$0xff]
        %v363 = vld [vmem:[#allocation2 + $0xf8] sm:$0x3]
        %v364 = vld [vmem:[%s1] sm:$0xff]
        %v365 = vld [vmem:[%s1 + $0x8] sm:$0xff]
        %v366 = vld [vmem:[%s1 + $0x10] sm:$0xff]
        %v367 = vld [vmem:[%s1 + $0x18] sm:$0xff]
        %vm400 = vcmask 1046528
        %v401 = vrot.slane %v332, 1
        %v402 = vrot.slane %v333, 1
        %v403 = vsel %vm400, %v401, %v402
        %v404 = vrot.slane %v334, 1
        %v405 = vsel %vm400, %v402, %v404
        %v406 = vrot.slane %v335, 1
        %v407 = vsel %vm400, %v404, %v406
        %v408 = vrot.slane %v336, 1
        %v409 = vrot.slane %v337, 1
        %v410 = vsel %vm400, %v408, %v409
        %v411 = vrot.slane %v338, 1
        %v412 = vsel %vm400, %v409, %v411
        %v413 = vrot.slane %v339, 1
        %v414 = vsel %vm400, %v411, %v413
        %v415 = vrot.slane %v340, 1
        %v416 = vrot.slane %v341, 1
        %v417 = vsel %vm400, %v415, %v416
        %v418 = vrot.slane %v342, 1
        %v419 = vsel %vm400, %v416, %v418
        %v420 = vrot.slane %v343, 1
        %v421 = vsel %vm400, %v418, %v420
        %v422 = vrot.slane %v344, 1
        %v423 = vrot.slane %v345, 1
        %v424 = vsel %vm400, %v422, %v423
        %v425 = vrot.slane %v346, 1
        %v426 = vsel %vm400, %v423, %v425
        %v427 = vrot.slane %v347, 1
        %v428 = vsel %vm400, %v425, %v427
        %v429 = vrot.slane %v348, 1
        %v430 = vrot.slane %v349, 1
        %v431 = vsel %vm400, %v429, %v430
        %v432 = vrot.slane %v350, 1
        %v433 = vsel %vm400, %v430, %v432
        %v434 = vrot.slane %v351, 1
        %v435 = vsel %vm400, %v432, %v434
        %v436 = vrot.slane %v352, 1
        %v437 = vrot.slane %v353, 1
        %v438 = vsel %vm400, %v436, %v437
        %v439 = vrot.slane %v354, 1
        %v440 = vsel %vm400, %v437, %v439
        %v441 = vrot.slane %v355, 1
        %v442 = vsel %vm400, %v439, %v441
        %v443 = vrot.slane %v356, 1
        %v444 = vrot.slane %v357, 1
        %v445 = vsel %vm400, %v443, %v444
        %v446 = vrot.slane %v358, 1
        %v447 = vsel %vm400, %v444, %v446
        %v448 = vrot.slane %v359, 1
        %v449 = vsel %vm400, %v446, %v448
        %v450 = vrot.slane %v360, 1
        %v451 = vrot.slane %v361, 1
        %v452 = vsel %vm400, %v450, %v451
        %v453 = vrot.slane %v362, 1
        %v454 = vsel %vm400, %v451, %v453
        %v455 = vrot.slane %v363, 1
        %v456 = vsel %vm400, %v453, %v455
        %s457 = scalar_lea.vmem %s1, 32
        %v458 = vld [vmem:[%s457] sm:$0xff]
        %v459 = vld [vmem:[%s457 + $0x8] sm:$0xff]
        %v460 = vld [vmem:[%s457 + $0x10] sm:$0xff]
        %v461 = vld [vmem:[%s457 + $0x18] sm:$0xff]
        %v462 = vsel %vm291, %v403, 0
        %v464 = vsel %vm291, %v405, 0
        %v466 = vsel %vm291, %v407, 0
        %v468 = vsel %vm291, %v410, 0
        %v470 = vsel %vm291, %v412, 0
        %v472 = vsel %vm291, %v414, 0
        %v474 = vsel %vm291, %v417, 0
        %v476 = vsel %vm291, %v419, 0
        %v478 = vsel %vm291, %v421, 0
        %v480 = vsel %vm291, %v424, 0
        %v482 = vsel %vm291, %v426, 0
        %v484 = vsel %vm291, %v428, 0
        %v486 = vsel %vm291, %v431, 0
        %v488 = vsel %vm291, %v433, 0
        %v490 = vsel %vm291, %v435, 0
        %v492 = vsel %vm291, %v438, 0
        %v494 = vsel %vm291, %v440, 0
        %v496 = vsel %vm291, %v442, 0
        %v498 = vsel %vm291, %v445, 0
        %v500 = vsel %vm291, %v447, 0
        %v502 = vsel %vm291, %v449, 0
        %v504 = vsel %vm291, %v452, 0
        %v506 = vsel %vm291, %v454, 0
        %v508 = vsel %vm291, %v456, 0
        %510 = vmatprep.subr.mxu0 0.0
        %511 = vmatpush1.msra.mxu0 0.0
        %512 = vmatprep.subr.mxu0 0.0
        %513 = vmatpush1.msra.mxu0 0.0
        %514 = vmatprep.subr.mxu0 0.0
        %515 = vmatpush1.msra.mxu0 0.0
        %516 = vmatprep.subr.mxu0 0.0
        %517 = vmatpush1.msra.mxu0 0.0
        %518 = vmatprep.subr.mxu0 0.0
        %519 = vmatpush1.msra.mxu0 0.0
        %520 = vmatprep.subr.mxu0 0.0
        %521 = vmatpush1.msra.mxu0 0.0
        %522 = vmatprep.subr.mxu0 0.0
        %523 = vmatpush1.msra.mxu0 0.0
        %524 = vmatprep.subr.mxu0 0.0
        %525 = vmatpush1.msra.mxu0 0.0
        %526 = vmatprep.subr.mxu0 0.0
        %527 = vmatpush1.msra.mxu0 0.0
        %528 = vmatprep.subr.mxu0 0.0
        %529 = vmatpush1.msra.mxu0 0.0
        %530 = vmatprep.subr.mxu0 0.0
        %531 = vmatpush1.msra.mxu0 0.0
        %532 = vmatprep.subr.mxu0 0.0
        %533 = vmatpush1.msra.mxu0 0.0
        %534 = vmatprep.subr.mxu0 0.0
        %535 = vmatpush1.msra.mxu0 %v461
        %536 = vmatprep.subr.mxu0 0.0
        %537 = vmatpush1.msra.mxu0 %v460
        %538 = vmatprep.subr.mxu0 0.0
        %539 = vmatpush1.msra.mxu0 %v459
        %540 = vmatprep.subr.mxu0 0.0
        %541 = vmatpush1.msra.mxu0 %v458
        %542 = vmatprep.subr.mxu0 0.0
        %543 = vmatpush2.msra.mxu0 0.0
        %544 = vmatprep.subr.mxu0 0.0
        %545 = vmatpush2.msra.mxu0 0.0
        %546 = vmatprep.subr.mxu0 0.0
        %547 = vmatpush2.msra.mxu0 0.0
        %548 = vmatprep.subr.mxu0 0.0
        %549 = vmatpush2.msra.mxu0 0.0
        %550 = vmatprep.subr.mxu0 0.0
        %551 = vmatpush2.msra.mxu0 0.0
        %552 = vmatprep.subr.mxu0 0.0
        %553 = vmatpush2.msra.mxu0 0.0
        %554 = vmatprep.subr.mxu0 0.0
        %555 = vmatpush2.msra.mxu0 0.0
        %556 = vmatprep.subr.mxu0 0.0
        %557 = vmatpush2.msra.mxu0 0.0
        %558 = vmatprep.subr.mxu0 0.0
        %559 = vmatpush2.msra.mxu0 0.0
        %560 = vmatprep.subr.mxu0 0.0
        %561 = vmatpush2.msra.mxu0 0.0
        %562 = vmatprep.subr.mxu0 0.0
        %563 = vmatpush2.msra.mxu0 0.0
        %564 = vmatprep.subr.mxu0 0.0
        %565 = vmatpush2.msra.mxu0 0.0
        %566 = vmatprep.subr.mxu0 0.0
        %567 = vmatpush2.msra.mxu0 0.0
        %568 = vmatprep.subr.mxu0 0.0
        %569 = vmatpush2.msra.mxu0 0.0
        %570 = vmatprep.subr.mxu0 0.0
        %571 = vmatpush2.msra.mxu0 0.0
        %572 = vmatprep.subr.mxu0 0.0
        %573 = vmatpush2.msra.mxu0 0.0
        %574 = vmatprep.mubr.f32.mxu0 0.0
        %575 = vmatmul.mubr.f32.gmra.mxu0 %v462
        %v576 = vpop.f32.mrf.mxu0
        %v577 = vadd.f32 0.0, %v576
        %v578 = vpop.f32.mrf.mxu0
        %579 = vmatprep.mubr.f32.mxu0 0.0
        %580 = vmatmul.mubr.f32.gmra.mxu0 %v464
        %v581 = vpop.f32.mrf.mxu0
        %v582 = vadd.f32 0.0, %v581
        %v583 = vpop.f32.mrf.mxu0
        %584 = vmatprep.mubr.f32.mxu0 0.0
        %585 = vmatmul.mubr.f32.gmra.mxu0 %v466
        %v586 = vpop.f32.mrf.mxu0
        %v587 = vadd.f32 0.0, %v586
        %v588 = vpop.f32.mrf.mxu0
        %589 = vmatprep.mubr.f32.mxu0 0.0
        %590 = vmatmul.mubr.f32.gmra.mxu0 %v468
        %v591 = vpop.f32.mrf.mxu0
        %v592 = vadd.f32 0.0, %v591
        %v593 = vpop.f32.mrf.mxu0
        %594 = vmatprep.mubr.f32.mxu0 0.0
        %595 = vmatmul.mubr.f32.gmra.mxu0 %v470
        %v596 = vpop.f32.mrf.mxu0
        %v597 = vadd.f32 0.0, %v596
        %v598 = vpop.f32.mrf.mxu0
        %599 = vmatprep.mubr.f32.mxu0 0.0
        %600 = vmatmul.mubr.f32.gmra.mxu0 %v472
        %v601 = vpop.f32.mrf.mxu0
        %v602 = vadd.f32 0.0, %v601
        %v603 = vpop.f32.mrf.mxu0
        %604 = vmatprep.mubr.f32.mxu0 0.0
        %605 = vmatmul.mubr.f32.gmra.mxu0 %v474
        %v606 = vpop.f32.mrf.mxu0
        %v607 = vadd.f32 0.0, %v606
        %v608 = vpop.f32.mrf.mxu0
        %609 = vmatprep.mubr.f32.mxu0 0.0
        %610 = vmatmul.mubr.f32.gmra.mxu0 %v476
        %v611 = vpop.f32.mrf.mxu0
        %v612 = vadd.f32 0.0, %v611
        %v613 = vpop.f32.mrf.mxu0
        %614 = vmatprep.mubr.f32.mxu0 0.0
        %615 = vmatmul.mubr.f32.gmra.mxu0 %v478
        %v616 = vpop.f32.mrf.mxu0
        %v617 = vadd.f32 0.0, %v616
        %v618 = vpop.f32.mrf.mxu0
        %619 = vmatprep.mubr.f32.mxu0 0.0
        %620 = vmatmul.mubr.f32.gmra.mxu0 %v480
        %v621 = vpop.f32.mrf.mxu0
        %v622 = vadd.f32 0.0, %v621
        %v623 = vpop.f32.mrf.mxu0
        %624 = vmatprep.mubr.f32.mxu0 0.0
        %625 = vmatmul.mubr.f32.gmra.mxu0 %v482
        %v626 = vpop.f32.mrf.mxu0
        %v627 = vadd.f32 0.0, %v626
        %v628 = vpop.f32.mrf.mxu0
        %629 = vmatprep.mubr.f32.mxu0 0.0
        %630 = vmatmul.mubr.f32.gmra.mxu0 %v484
        %v631 = vpop.f32.mrf.mxu0
        %v632 = vadd.f32 0.0, %v631
        %v633 = vpop.f32.mrf.mxu0
        %634 = vmatprep.mubr.f32.mxu0 0.0
        %635 = vmatmul.mubr.f32.gmra.mxu0 %v486
        %v636 = vpop.f32.mrf.mxu0
        %v637 = vadd.f32 0.0, %v636
        %v638 = vpop.f32.mrf.mxu0
        %639 = vmatprep.mubr.f32.mxu0 0.0
        %640 = vmatmul.mubr.f32.gmra.mxu0 %v488
        %v641 = vpop.f32.mrf.mxu0
        %v642 = vadd.f32 0.0, %v641
        %v643 = vpop.f32.mrf.mxu0
        %644 = vmatprep.mubr.f32.mxu0 0.0
        %645 = vmatmul.mubr.f32.gmra.mxu0 %v490
        %v646 = vpop.f32.mrf.mxu0
        %v647 = vadd.f32 0.0, %v646
        %v648 = vpop.f32.mrf.mxu0
        %649 = vmatprep.mubr.f32.mxu0 0.0
        %650 = vmatmul.mubr.f32.gmra.mxu0 %v492
        %v651 = vpop.f32.mrf.mxu0
        %v652 = vadd.f32 0.0, %v651
        %v653 = vpop.f32.mrf.mxu0
        %654 = vmatprep.mubr.f32.mxu0 0.0
        %655 = vmatmul.mubr.f32.gmra.mxu0 %v494
        %v656 = vpop.f32.mrf.mxu0
        %v657 = vadd.f32 0.0, %v656
        %v658 = vpop.f32.mrf.mxu0
        %659 = vmatprep.mubr.f32.mxu0 0.0
        %660 = vmatmul.mubr.f32.gmra.mxu0 %v496
        %v661 = vpop.f32.mrf.mxu0
        %v662 = vadd.f32 0.0, %v661
        %v663 = vpop.f32.mrf.mxu0
        %664 = vmatprep.mubr.f32.mxu0 0.0
        %665 = vmatmul.mubr.f32.gmra.mxu0 %v498
        %v666 = vpop.f32.mrf.mxu0
        %v667 = vadd.f32 0.0, %v666
        %v668 = vpop.f32.mrf.mxu0
        %669 = vmatprep.mubr.f32.mxu0 0.0
        %670 = vmatmul.mubr.f32.gmra.mxu0 %v500
        %v671 = vpop.f32.mrf.mxu0
        %v672 = vadd.f32 0.0, %v671
        %v673 = vpop.f32.mrf.mxu0
        %674 = vmatprep.mubr.f32.mxu0 0.0
        %675 = vmatmul.mubr.f32.gmra.mxu0 %v502
        %v676 = vpop.f32.mrf.mxu0
        %v677 = vadd.f32 0.0, %v676
        %v678 = vpop.f32.mrf.mxu0
        %679 = vmatprep.mubr.f32.mxu0 0.0
        %680 = vmatmul.mubr.f32.gmra.mxu0 %v504
        %v681 = vpop.f32.mrf.mxu0
        %v682 = vadd.f32 0.0, %v681
        %v683 = vpop.f32.mrf.mxu0
        %684 = vmatprep.mubr.f32.mxu0 0.0
        %685 = vmatmul.mubr.f32.gmra.mxu0 %v506
        %v686 = vpop.f32.mrf.mxu0
        %v687 = vadd.f32 0.0, %v686
        %v688 = vpop.f32.mrf.mxu0
        %689 = vmatprep.mubr.f32.mxu0 0.0
        %690 = vmatmul.mubr.f32.gmra.mxu0 %v508
        %v691 = vpop.f32.mrf.mxu0
        %v692 = vadd.f32 0.0, %v691
        %v693 = vpop.f32.mrf.mxu0
        %694 = vdwg.mxu0
        %v695 = vsel %vm291, %v332, 0
        %v697 = vsel %vm291, %v333, 0
        %v699 = vsel %vm291, %v334, 0
        %v701 = vsel %vm291, %v336, 0
        %v703 = vsel %vm291, %v337, 0
        %v705 = vsel %vm291, %v338, 0
        %v707 = vsel %vm291, %v340, 0
        %v709 = vsel %vm291, %v341, 0
        %v711 = vsel %vm291, %v342, 0
        %v713 = vsel %vm291, %v344, 0
        %v715 = vsel %vm291, %v345, 0
        %v717 = vsel %vm291, %v346, 0
        %v719 = vsel %vm291, %v348, 0
        %v721 = vsel %vm291, %v349, 0
        %v723 = vsel %vm291, %v350, 0
        %v725 = vsel %vm291, %v352, 0
        %v727 = vsel %vm291, %v353, 0
        %v729 = vsel %vm291, %v354, 0
        %v731 = vsel %vm291, %v356, 0
        %v733 = vsel %vm291, %v357, 0
        %v735 = vsel %vm291, %v358, 0
        %v737 = vsel %vm291, %v360, 0
        %v739 = vsel %vm291, %v361, 0
        %v741 = vsel %vm291, %v362, 0
        %743 = vmatprep.subr.mxu0 0.0
        %744 = vmatpush1.msra.mxu0 0.0
        %745 = vmatprep.subr.mxu0 0.0
        %746 = vmatpush1.msra.mxu0 0.0
        %747 = vmatprep.subr.mxu0 0.0
        %748 = vmatpush1.msra.mxu0 0.0
        %749 = vmatprep.subr.mxu0 0.0
        %750 = vmatpush1.msra.mxu0 0.0
        %751 = vmatprep.subr.mxu0 0.0
        %752 = vmatpush1.msra.mxu0 0.0
        %753 = vmatprep.subr.mxu0 0.0
        %754 = vmatpush1.msra.mxu0 0.0
        %755 = vmatprep.subr.mxu0 0.0
        %756 = vmatpush1.msra.mxu0 0.0
        %757 = vmatprep.subr.mxu0 0.0
        %758 = vmatpush1.msra.mxu0 0.0
        %759 = vmatprep.subr.mxu0 0.0
        %760 = vmatpush1.msra.mxu0 0.0
        %761 = vmatprep.subr.mxu0 0.0
        %762 = vmatpush1.msra.mxu0 0.0
        %763 = vmatprep.subr.mxu0 0.0
        %764 = vmatpush1.msra.mxu0 0.0
        %765 = vmatprep.subr.mxu0 0.0
        %766 = vmatpush1.msra.mxu0 0.0
        %767 = vmatprep.subr.mxu0 0.0
        %768 = vmatpush1.msra.mxu0 %v367
        %769 = vmatprep.subr.mxu0 0.0
        %770 = vmatpush1.msra.mxu0 %v366
        %771 = vmatprep.subr.mxu0 0.0
        %772 = vmatpush1.msra.mxu0 %v365
        %773 = vmatprep.subr.mxu0 0.0
        %774 = vmatpush1.msra.mxu0 %v364
        %775 = vmatprep.subr.mxu0 0.0
        %776 = vmatpush2.msra.mxu0 0.0
        %777 = vmatprep.subr.mxu0 0.0
        %778 = vmatpush2.msra.mxu0 0.0
        %779 = vmatprep.subr.mxu0 0.0
        %780 = vmatpush2.msra.mxu0 0.0
        %781 = vmatprep.subr.mxu0 0.0
        %782 = vmatpush2.msra.mxu0 0.0
        %783 = vmatprep.subr.mxu0 0.0
        %784 = vmatpush2.msra.mxu0 0.0
        %785 = vmatprep.subr.mxu0 0.0
        %786 = vmatpush2.msra.mxu0 0.0
        %787 = vmatprep.subr.mxu0 0.0
        %788 = vmatpush2.msra.mxu0 0.0
        %789 = vmatprep.subr.mxu0 0.0
        %790 = vmatpush2.msra.mxu0 0.0
        %791 = vmatprep.subr.mxu0 0.0
        %792 = vmatpush2.msra.mxu0 0.0
        %793 = vmatprep.subr.mxu0 0.0
        %794 = vmatpush2.msra.mxu0 0.0
        %795 = vmatprep.subr.mxu0 0.0
        %796 = vmatpush2.msra.mxu0 0.0
        %797 = vmatprep.subr.mxu0 0.0
        %798 = vmatpush2.msra.mxu0 0.0
        %799 = vmatprep.subr.mxu0 0.0
        %800 = vmatpush2.msra.mxu0 0.0
        %801 = vmatprep.subr.mxu0 0.0
        %802 = vmatpush2.msra.mxu0 0.0
        %803 = vmatprep.subr.mxu0 0.0
        %804 = vmatpush2.msra.mxu0 0.0
        %805 = vmatprep.subr.mxu0 0.0
        %806 = vmatpush2.msra.mxu0 0.0
        %807 = vmatprep.mubr.f32.mxu0 0.0
        %808 = vmatmul.mubr.f32.gmra.mxu0 %v695
        %v809 = vpop.f32.mrf.mxu0
        %v810 = vadd.f32 %v577, %v809
        %v811 = vpop.f32.mrf.mxu0
        %812 = vmatprep.mubr.f32.mxu0 0.0
        %813 = vmatmul.mubr.f32.gmra.mxu0 %v697
        %v814 = vpop.f32.mrf.mxu0
        %v815 = vadd.f32 %v582, %v814
        %v816 = vpop.f32.mrf.mxu0
        %817 = vmatprep.mubr.f32.mxu0 0.0
        %818 = vmatmul.mubr.f32.gmra.mxu0 %v699
        %v819 = vpop.f32.mrf.mxu0
        %v820 = vadd.f32 %v587, %v819
        %v821 = vpop.f32.mrf.mxu0
        %822 = vmatprep.mubr.f32.mxu0 0.0
        %823 = vmatmul.mubr.f32.gmra.mxu0 %v701
        %v824 = vpop.f32.mrf.mxu0
        %v825 = vadd.f32 %v592, %v824
        %v826 = vpop.f32.mrf.mxu0
        %827 = vmatprep.mubr.f32.mxu0 0.0
        %828 = vmatmul.mubr.f32.gmra.mxu0 %v703
        %v829 = vpop.f32.mrf.mxu0
        %v830 = vadd.f32 %v597, %v829
        %v831 = vpop.f32.mrf.mxu0
        %832 = vmatprep.mubr.f32.mxu0 0.0
        %833 = vmatmul.mubr.f32.gmra.mxu0 %v705
        %v834 = vpop.f32.mrf.mxu0
        %v835 = vadd.f32 %v602, %v834
        %v836 = vpop.f32.mrf.mxu0
        %837 = vmatprep.mubr.f32.mxu0 0.0
        %838 = vmatmul.mubr.f32.gmra.mxu0 %v707
        %v839 = vpop.f32.mrf.mxu0
        %v840 = vadd.f32 %v607, %v839
        %v841 = vpop.f32.mrf.mxu0
        %842 = vmatprep.mubr.f32.mxu0 0.0
        %843 = vmatmul.mubr.f32.gmra.mxu0 %v709
        %v844 = vpop.f32.mrf.mxu0
        %v845 = vadd.f32 %v612, %v844
        %v846 = vpop.f32.mrf.mxu0
        %847 = vmatprep.mubr.f32.mxu0 0.0
        %848 = vmatmul.mubr.f32.gmra.mxu0 %v711
        %v849 = vpop.f32.mrf.mxu0
        %v850 = vadd.f32 %v617, %v849
        %v851 = vpop.f32.mrf.mxu0
        %852 = vmatprep.mubr.f32.mxu0 0.0
        %853 = vmatmul.mubr.f32.gmra.mxu0 %v713
        %v854 = vpop.f32.mrf.mxu0
        %v855 = vadd.f32 %v622, %v854
        %v856 = vpop.f32.mrf.mxu0
        %857 = vmatprep.mubr.f32.mxu0 0.0
        %858 = vmatmul.mubr.f32.gmra.mxu0 %v715
        %v859 = vpop.f32.mrf.mxu0
        %v860 = vadd.f32 %v627, %v859
        %v861 = vpop.f32.mrf.mxu0
        %862 = vmatprep.mubr.f32.mxu0 0.0
        %863 = vmatmul.mubr.f32.gmra.mxu0 %v717
        %v864 = vpop.f32.mrf.mxu0
        %v865 = vadd.f32 %v632, %v864
        %v866 = vpop.f32.mrf.mxu0
        %867 = vmatprep.mubr.f32.mxu0 0.0
        %868 = vmatmul.mubr.f32.gmra.mxu0 %v719
        %v869 = vpop.f32.mrf.mxu0
        %v870 = vadd.f32 %v637, %v869
        %v871 = vpop.f32.mrf.mxu0
        %872 = vmatprep.mubr.f32.mxu0 0.0
        %873 = vmatmul.mubr.f32.gmra.mxu0 %v721
        %v874 = vpop.f32.mrf.mxu0
        %v875 = vadd.f32 %v642, %v874
        %v876 = vpop.f32.mrf.mxu0
        %877 = vmatprep.mubr.f32.mxu0 0.0
        %878 = vmatmul.mubr.f32.gmra.mxu0 %v723
        %v879 = vpop.f32.mrf.mxu0
        %v880 = vadd.f32 %v647, %v879
        %v881 = vpop.f32.mrf.mxu0
        %882 = vmatprep.mubr.f32.mxu0 0.0
        %883 = vmatmul.mubr.f32.gmra.mxu0 %v725
        %v884 = vpop.f32.mrf.mxu0
        %v885 = vadd.f32 %v652, %v884
        %v886 = vpop.f32.mrf.mxu0
        %887 = vmatprep.mubr.f32.mxu0 0.0
        %888 = vmatmul.mubr.f32.gmra.mxu0 %v727
        %v889 = vpop.f32.mrf.mxu0
        %v890 = vadd.f32 %v657, %v889
        %v891 = vpop.f32.mrf.mxu0
        %892 = vmatprep.mubr.f32.mxu0 0.0
        %893 = vmatmul.mubr.f32.gmra.mxu0 %v729
        %v894 = vpop.f32.mrf.mxu0
        %v895 = vadd.f32 %v662, %v894
        %v896 = vpop.f32.mrf.mxu0
        %897 = vmatprep.mubr.f32.mxu0 0.0
        %898 = vmatmul.mubr.f32.gmra.mxu0 %v731
        %v899 = vpop.f32.mrf.mxu0
        %v900 = vadd.f32 %v667, %v899
        %v901 = vpop.f32.mrf.mxu0
        %902 = vmatprep.mubr.f32.mxu0 0.0
        %903 = vmatmul.mubr.f32.gmra.mxu0 %v733
        %v904 = vpop.f32.mrf.mxu0
        %v905 = vadd.f32 %v672, %v904
        %v906 = vpop.f32.mrf.mxu0
        %907 = vmatprep.mubr.f32.mxu0 0.0
        %908 = vmatmul.mubr.f32.gmra.mxu0 %v735
        %v909 = vpop.f32.mrf.mxu0
        %v910 = vadd.f32 %v677, %v909
        %v911 = vpop.f32.mrf.mxu0
        %912 = vmatprep.mubr.f32.mxu0 0.0
        %913 = vmatmul.mubr.f32.gmra.mxu0 %v737
        %v914 = vpop.f32.mrf.mxu0
        %v915 = vadd.f32 %v682, %v914
        %v916 = vpop.f32.mrf.mxu0
        %917 = vmatprep.mubr.f32.mxu0 0.0
        %918 = vmatmul.mubr.f32.gmra.mxu0 %v739
        %v919 = vpop.f32.mrf.mxu0
        %v920 = vadd.f32 %v687, %v919
        %v921 = vpop.f32.mrf.mxu0
        %922 = vmatprep.mubr.f32.mxu0 0.0
        %923 = vmatmul.mubr.f32.gmra.mxu0 %v741
        %v924 = vpop.f32.mrf.mxu0
        %v925 = vadd.f32 %v692, %v924
        %v926 = vpop.f32.mrf.mxu0
        %927 = vdwg.mxu0
        %vm928 = vcmask 1045504
        %v929 = vrot.slane %v332, 2
        %v930 = vrot.slane %v333, 2
        %v931 = vsel %vm928, %v929, %v930
        %v932 = vrot.slane %v334, 2
        %v933 = vsel %vm928, %v930, %v932
        %v934 = vrot.slane %v335, 2
        %v935 = vsel %vm928, %v932, %v934
        %v936 = vrot.slane %v336, 2
        %v937 = vrot.slane %v337, 2
        %v938 = vsel %vm928, %v936, %v937
        %v939 = vrot.slane %v338, 2
        %v940 = vsel %vm928, %v937, %v939
        %v941 = vrot.slane %v339, 2
        %v942 = vsel %vm928, %v939, %v941
        %v943 = vrot.slane %v340, 2
        %v944 = vrot.slane %v341, 2
        %v945 = vsel %vm928, %v943, %v944
        %v946 = vrot.slane %v342, 2
        %v947 = vsel %vm928, %v944, %v946
        %v948 = vrot.slane %v343, 2
        %v949 = vsel %vm928, %v946, %v948
        %v950 = vrot.slane %v344, 2
        %v951 = vrot.slane %v345, 2
        %v952 = vsel %vm928, %v950, %v951
        %v953 = vrot.slane %v346, 2
        %v954 = vsel %vm928, %v951, %v953
        %v955 = vrot.slane %v347, 2
        %v956 = vsel %vm928, %v953, %v955
        %v957 = vrot.slane %v348, 2
        %v958 = vrot.slane %v349, 2
        %v959 = vsel %vm928, %v957, %v958
        %v960 = vrot.slane %v350, 2
        %v961 = vsel %vm928, %v958, %v960
        %v962 = vrot.slane %v351, 2
        %v963 = vsel %vm928, %v960, %v962
        %v964 = vrot.slane %v352, 2
        %v965 = vrot.slane %v353, 2
        %v966 = vsel %vm928, %v964, %v965
        %v967 = vrot.slane %v354, 2
        %v968 = vsel %vm928, %v965, %v967
        %v969 = vrot.slane %v355, 2
        %v970 = vsel %vm928, %v967, %v969
        %v971 = vrot.slane %v356, 2
        %v972 = vrot.slane %v357, 2
        %v973 = vsel %vm928, %v971, %v972
        %v974 = vrot.slane %v358, 2
        %v975 = vsel %vm928, %v972, %v974
        %v976 = vrot.slane %v359, 2
        %v977 = vsel %vm928, %v974, %v976
        %v978 = vrot.slane %v360, 2
        %v979 = vrot.slane %v361, 2
        %v980 = vsel %vm928, %v978, %v979
        %v981 = vrot.slane %v362, 2
        %v982 = vsel %vm928, %v979, %v981
        %v983 = vrot.slane %v363, 2
        %v984 = vsel %vm928, %v981, %v983
        %s985 = scalar_lea.vmem %s1, 64
        %v986 = vld [vmem:[%s985] sm:$0xff]
        %v987 = vld [vmem:[%s985 + $0x8] sm:$0xff]
        %v988 = vld [vmem:[%s985 + $0x10] sm:$0xff]
        %v989 = vld [vmem:[%s985 + $0x18] sm:$0xff]
        %v990 = vsel %vm291, %v931, 0
        %v992 = vsel %vm291, %v933, 0
        %v994 = vsel %vm291, %v935, 0
        %v996 = vsel %vm291, %v938, 0
        %v998 = vsel %vm291, %v940, 0
        %v1000 = vsel %vm291, %v942, 0
        %v1002 = vsel %vm291, %v945, 0
        %v1004 = vsel %vm291, %v947, 0
        %v1006 = vsel %vm291, %v949, 0
        %v1008 = vsel %vm291, %v952, 0
        %v1010 = vsel %vm291, %v954, 0
        %v1012 = vsel %vm291, %v956, 0
        %v1014 = vsel %vm291, %v959, 0
        %v1016 = vsel %vm291, %v961, 0
        %v1018 = vsel %vm291, %v963, 0
        %v1020 = vsel %vm291, %v966, 0
        %v1022 = vsel %vm291, %v968, 0
        %v1024 = vsel %vm291, %v970, 0
        %v1026 = vsel %vm291, %v973, 0
        %v1028 = vsel %vm291, %v975, 0
        %v1030 = vsel %vm291, %v977, 0
        %v1032 = vsel %vm291, %v980, 0
        %v1034 = vsel %vm291, %v982, 0
        %v1036 = vsel %vm291, %v984, 0
        %1038 = vmatprep.subr.mxu0 0.0
        %1039 = vmatpush1.msra.mxu0 0.0
        %1040 = vmatprep.subr.mxu0 0.0
        %1041 = vmatpush1.msra.mxu0 0.0
        %1042 = vmatprep.subr.mxu0 0.0
        %1043 = vmatpush1.msra.mxu0 0.0
        %1044 = vmatprep.subr.mxu0 0.0
        %1045 = vmatpush1.msra.mxu0 0.0
        %1046 = vmatprep.subr.mxu0 0.0
        %1047 = vmatpush1.msra.mxu0 0.0
        %1048 = vmatprep.subr.mxu0 0.0
        %1049 = vmatpush1.msra.mxu0 0.0
        %1050 = vmatprep.subr.mxu0 0.0
        %1051 = vmatpush1.msra.mxu0 0.0
        %1052 = vmatprep.subr.mxu0 0.0
        %1053 = vmatpush1.msra.mxu0 0.0
        %1054 = vmatprep.subr.mxu0 0.0
        %1055 = vmatpush1.msra.mxu0 0.0
        %1056 = vmatprep.subr.mxu0 0.0
        %1057 = vmatpush1.msra.mxu0 0.0
        %1058 = vmatprep.subr.mxu0 0.0
        %1059 = vmatpush1.msra.mxu0 0.0
        %1060 = vmatprep.subr.mxu0 0.0
        %1061 = vmatpush1.msra.mxu0 0.0
        %1062 = vmatprep.subr.mxu0 0.0
        %1063 = vmatpush1.msra.mxu0 %v989
        %1064 = vmatprep.subr.mxu0 0.0
        %1065 = vmatpush1.msra.mxu0 %v988
        %1066 = vmatprep.subr.mxu0 0.0
        %1067 = vmatpush1.msra.mxu0 %v987
        %1068 = vmatprep.subr.mxu0 0.0
        %1069 = vmatpush1.msra.mxu0 %v986
        %1070 = vmatprep.subr.mxu0 0.0
        %1071 = vmatpush2.msra.mxu0 0.0
        %1072 = vmatprep.subr.mxu0 0.0
        %1073 = vmatpush2.msra.mxu0 0.0
        %1074 = vmatprep.subr.mxu0 0.0
        %1075 = vmatpush2.msra.mxu0 0.0
        %1076 = vmatprep.subr.mxu0 0.0
        %1077 = vmatpush2.msra.mxu0 0.0
        %1078 = vmatprep.subr.mxu0 0.0
        %1079 = vmatpush2.msra.mxu0 0.0
        %1080 = vmatprep.subr.mxu0 0.0
        %1081 = vmatpush2.msra.mxu0 0.0
        %1082 = vmatprep.subr.mxu0 0.0
        %1083 = vmatpush2.msra.mxu0 0.0
        %1084 = vmatprep.subr.mxu0 0.0
        %1085 = vmatpush2.msra.mxu0 0.0
        %1086 = vmatprep.subr.mxu0 0.0
        %1087 = vmatpush2.msra.mxu0 0.0
        %1088 = vmatprep.subr.mxu0 0.0
        %1089 = vmatpush2.msra.mxu0 0.0
        %1090 = vmatprep.subr.mxu0 0.0
        %1091 = vmatpush2.msra.mxu0 0.0
        %1092 = vmatprep.subr.mxu0 0.0
        %1093 = vmatpush2.msra.mxu0 0.0
        %1094 = vmatprep.subr.mxu0 0.0
        %1095 = vmatpush2.msra.mxu0 0.0
        %1096 = vmatprep.subr.mxu0 0.0
        %1097 = vmatpush2.msra.mxu0 0.0
        %1098 = vmatprep.subr.mxu0 0.0
        %1099 = vmatpush2.msra.mxu0 0.0
        %1100 = vmatprep.subr.mxu0 0.0
        %1101 = vmatpush2.msra.mxu0 0.0
        %1102 = vmatprep.mubr.f32.mxu0 0.0
        %1103 = vmatmul.mubr.f32.gmra.mxu0 %v990
        %v1104 = vpop.f32.mrf.mxu0
        %v1105 = vadd.f32 0.0, %v1104
        %v1106 = vpop.f32.mrf.mxu0
        %1107 = vmatprep.mubr.f32.mxu0 0.0
        %1108 = vmatmul.mubr.f32.gmra.mxu0 %v992
        %v1109 = vpop.f32.mrf.mxu0
        %v1110 = vadd.f32 0.0, %v1109
        %v1111 = vpop.f32.mrf.mxu0
        %1112 = vmatprep.mubr.f32.mxu0 0.0
        %1113 = vmatmul.mubr.f32.gmra.mxu0 %v994
        %v1114 = vpop.f32.mrf.mxu0
        %v1115 = vadd.f32 0.0, %v1114
        %v1116 = vpop.f32.mrf.mxu0
        %1117 = vmatprep.mubr.f32.mxu0 0.0
        %1118 = vmatmul.mubr.f32.gmra.mxu0 %v996
        %v1119 = vpop.f32.mrf.mxu0
        %v1120 = vadd.f32 0.0, %v1119
        %v1121 = vpop.f32.mrf.mxu0
        %1122 = vmatprep.mubr.f32.mxu0 0.0
        %1123 = vmatmul.mubr.f32.gmra.mxu0 %v998
        %v1124 = vpop.f32.mrf.mxu0
        %v1125 = vadd.f32 0.0, %v1124
        %v1126 = vpop.f32.mrf.mxu0
        %1127 = vmatprep.mubr.f32.mxu0 0.0
        %1128 = vmatmul.mubr.f32.gmra.mxu0 %v1000
        %v1129 = vpop.f32.mrf.mxu0
        %v1130 = vadd.f32 0.0, %v1129
        %v1131 = vpop.f32.mrf.mxu0
        %1132 = vmatprep.mubr.f32.mxu0 0.0
        %1133 = vmatmul.mubr.f32.gmra.mxu0 %v1002
        %v1134 = vpop.f32.mrf.mxu0
        %v1135 = vadd.f32 0.0, %v1134
        %v1136 = vpop.f32.mrf.mxu0
        %1137 = vmatprep.mubr.f32.mxu0 0.0
        %1138 = vmatmul.mubr.f32.gmra.mxu0 %v1004
        %v1139 = vpop.f32.mrf.mxu0
        %v1140 = vadd.f32 0.0, %v1139
        %v1141 = vpop.f32.mrf.mxu0
        %1142 = vmatprep.mubr.f32.mxu0 0.0
        %1143 = vmatmul.mubr.f32.gmra.mxu0 %v1006
        %v1144 = vpop.f32.mrf.mxu0
        %v1145 = vadd.f32 0.0, %v1144
        %v1146 = vpop.f32.mrf.mxu0
        %1147 = vmatprep.mubr.f32.mxu0 0.0
        %1148 = vmatmul.mubr.f32.gmra.mxu0 %v1008
        %v1149 = vpop.f32.mrf.mxu0
        %v1150 = vadd.f32 0.0, %v1149
        %v1151 = vpop.f32.mrf.mxu0
        %1152 = vmatprep.mubr.f32.mxu0 0.0
        %1153 = vmatmul.mubr.f32.gmra.mxu0 %v1010
        %v1154 = vpop.f32.mrf.mxu0
        %v1155 = vadd.f32 0.0, %v1154
        %v1156 = vpop.f32.mrf.mxu0
        %1157 = vmatprep.mubr.f32.mxu0 0.0
        %1158 = vmatmul.mubr.f32.gmra.mxu0 %v1012
        %v1159 = vpop.f32.mrf.mxu0
        %v1160 = vadd.f32 0.0, %v1159
        %v1161 = vpop.f32.mrf.mxu0
        %1162 = vmatprep.mubr.f32.mxu0 0.0
        %1163 = vmatmul.mubr.f32.gmra.mxu0 %v1014
        %v1164 = vpop.f32.mrf.mxu0
        %v1165 = vadd.f32 0.0, %v1164
        %v1166 = vpop.f32.mrf.mxu0
        %1167 = vmatprep.mubr.f32.mxu0 0.0
        %1168 = vmatmul.mubr.f32.gmra.mxu0 %v1016
        %v1169 = vpop.f32.mrf.mxu0
        %v1170 = vadd.f32 0.0, %v1169
        %v1171 = vpop.f32.mrf.mxu0
        %1172 = vmatprep.mubr.f32.mxu0 0.0
        %1173 = vmatmul.mubr.f32.gmra.mxu0 %v1018
        %v1174 = vpop.f32.mrf.mxu0
        %v1175 = vadd.f32 0.0, %v1174
        %v1176 = vpop.f32.mrf.mxu0
        %1177 = vmatprep.mubr.f32.mxu0 0.0
        %1178 = vmatmul.mubr.f32.gmra.mxu0 %v1020
        %v1179 = vpop.f32.mrf.mxu0
        %v1180 = vadd.f32 0.0, %v1179
        %v1181 = vpop.f32.mrf.mxu0
        %1182 = vmatprep.mubr.f32.mxu0 0.0
        %1183 = vmatmul.mubr.f32.gmra.mxu0 %v1022
        %v1184 = vpop.f32.mrf.mxu0
        %v1185 = vadd.f32 0.0, %v1184
        %v1186 = vpop.f32.mrf.mxu0
        %1187 = vmatprep.mubr.f32.mxu0 0.0
        %1188 = vmatmul.mubr.f32.gmra.mxu0 %v1024
        %v1189 = vpop.f32.mrf.mxu0
        %v1190 = vadd.f32 0.0, %v1189
        %v1191 = vpop.f32.mrf.mxu0
        %1192 = vmatprep.mubr.f32.mxu0 0.0
        %1193 = vmatmul.mubr.f32.gmra.mxu0 %v1026
        %v1194 = vpop.f32.mrf.mxu0
        %v1195 = vadd.f32 0.0, %v1194
        %v1196 = vpop.f32.mrf.mxu0
        %1197 = vmatprep.mubr.f32.mxu0 0.0
        %1198 = vmatmul.mubr.f32.gmra.mxu0 %v1028
        %v1199 = vpop.f32.mrf.mxu0
        %v1200 = vadd.f32 0.0, %v1199
        %v1201 = vpop.f32.mrf.mxu0
        %1202 = vmatprep.mubr.f32.mxu0 0.0
        %1203 = vmatmul.mubr.f32.gmra.mxu0 %v1030
        %v1204 = vpop.f32.mrf.mxu0
        %v1205 = vadd.f32 0.0, %v1204
        %v1206 = vpop.f32.mrf.mxu0
        %1207 = vmatprep.mubr.f32.mxu0 0.0
        %1208 = vmatmul.mubr.f32.gmra.mxu0 %v1032
        %v1209 = vpop.f32.mrf.mxu0
        %v1210 = vadd.f32 0.0, %v1209
        %v1211 = vpop.f32.mrf.mxu0
        %1212 = vmatprep.mubr.f32.mxu0 0.0
        %1213 = vmatmul.mubr.f32.gmra.mxu0 %v1034
        %v1214 = vpop.f32.mrf.mxu0
        %v1215 = vadd.f32 0.0, %v1214
        %v1216 = vpop.f32.mrf.mxu0
        %1217 = vmatprep.mubr.f32.mxu0 0.0
        %1218 = vmatmul.mubr.f32.gmra.mxu0 %v1036
        %v1219 = vpop.f32.mrf.mxu0
        %v1220 = vadd.f32 0.0, %v1219
        %v1221 = vpop.f32.mrf.mxu0
        %1222 = vdwg.mxu0
        %v1223 = vadd.f32 %v810, %v1105
        %v1224 = vadd.f32 %v815, %v1110
        %v1225 = vadd.f32 %v820, %v1115
        %v1226 = vadd.f32 %v825, %v1120
        %v1227 = vadd.f32 %v830, %v1125
        %v1228 = vadd.f32 %v835, %v1130
        %v1229 = vadd.f32 %v840, %v1135
        %v1230 = vadd.f32 %v845, %v1140
        %v1231 = vadd.f32 %v850, %v1145
        %v1232 = vadd.f32 %v855, %v1150
        %v1233 = vadd.f32 %v860, %v1155
        %v1234 = vadd.f32 %v865, %v1160
        %v1235 = vadd.f32 %v870, %v1165
        %v1236 = vadd.f32 %v875, %v1170
        %v1237 = vadd.f32 %v880, %v1175
        %v1238 = vadd.f32 %v885, %v1180
        %v1239 = vadd.f32 %v890, %v1185
        %v1240 = vadd.f32 %v895, %v1190
        %v1241 = vadd.f32 %v900, %v1195
        %v1242 = vadd.f32 %v905, %v1200
        %v1243 = vadd.f32 %v910, %v1205
        %v1244 = vadd.f32 %v915, %v1210
        %v1245 = vadd.f32 %v920, %v1215
        %v1246 = vadd.f32 %v925, %v1220
        %v1247 = vld [vmem:[%s2] sm:$0x1]
        %v1249 = vlaneseq
        %v1250 = vshrl.u32 %v1249, 7
        %v1251 = vsub.s32 0, %v1250
        %v1252 = vrot.slane %v1247, %v1251
        %v1254 = vadd.f32 %v1223, %v1252
        %v1255 = vadd.f32 %v1224, %v1252
        %v1256 = vadd.f32 %v1225, %v1252
        %v1257 = vadd.f32 %v1226, %v1252
        %v1258 = vadd.f32 %v1227, %v1252
        %v1259 = vadd.f32 %v1228, %v1252
        %v1260 = vadd.f32 %v1229, %v1252
        %v1261 = vadd.f32 %v1230, %v1252
        %v1262 = vadd.f32 %v1231, %v1252
        %v1263 = vadd.f32 %v1232, %v1252
        %v1264 = vadd.f32 %v1233, %v1252
        %v1265 = vadd.f32 %v1234, %v1252
        %v1266 = vadd.f32 %v1235, %v1252
        %v1267 = vadd.f32 %v1236, %v1252
        %v1268 = vadd.f32 %v1237, %v1252
        %v1269 = vadd.f32 %v1238, %v1252
        %v1270 = vadd.f32 %v1239, %v1252
        %v1271 = vadd.f32 %v1240, %v1252
        %v1272 = vadd.f32 %v1241, %v1252
        %v1273 = vadd.f32 %v1242, %v1252
        %v1274 = vadd.f32 %v1243, %v1252
        %v1275 = vadd.f32 %v1244, %v1252
        %v1276 = vadd.f32 %v1245, %v1252
        %v1277 = vadd.f32 %v1246, %v1252
        %vm1278 = vcmp.gt.f32.partialorder %v1254, 0.0
        %vm1279 = vcmp.gt.f32.partialorder %v1255, 0.0
        %vm1280 = vcmp.gt.f32.partialorder %v1256, 0.0
        %vm1281 = vcmp.gt.f32.partialorder %v1257, 0.0
        %vm1282 = vcmp.gt.f32.partialorder %v1258, 0.0
        %vm1283 = vcmp.gt.f32.partialorder %v1259, 0.0
        %vm1284 = vcmp.gt.f32.partialorder %v1260, 0.0
        %vm1285 = vcmp.gt.f32.partialorder %v1261, 0.0
        %vm1286 = vcmp.gt.f32.partialorder %v1262, 0.0
        %vm1287 = vcmp.gt.f32.partialorder %v1263, 0.0
        %vm1288 = vcmp.gt.f32.partialorder %v1264, 0.0
        %vm1289 = vcmp.gt.f32.partialorder %v1265, 0.0
        %vm1290 = vcmp.gt.f32.partialorder %v1266, 0.0
        %vm1291 = vcmp.gt.f32.partialorder %v1267, 0.0
        %vm1292 = vcmp.gt.f32.partialorder %v1268, 0.0
        %vm1293 = vcmp.gt.f32.partialorder %v1269, 0.0
        %vm1294 = vcmp.gt.f32.partialorder %v1270, 0.0
        %vm1295 = vcmp.gt.f32.partialorder %v1271, 0.0
        %vm1296 = vcmp.gt.f32.partialorder %v1272, 0.0
        %vm1297 = vcmp.gt.f32.partialorder %v1273, 0.0
        %vm1298 = vcmp.gt.f32.partialorder %v1274, 0.0
        %vm1299 = vcmp.gt.f32.partialorder %v1275, 0.0
        %vm1300 = vcmp.gt.f32.partialorder %v1276, 0.0
        %vm1301 = vcmp.gt.f32.partialorder %v1277, 0.0
        %v1302 = vmul.f32 %v1254, 0.01
        %v1303 = vmul.f32 %v1255, 0.01
        %v1304 = vmul.f32 %v1256, 0.01
        %v1305 = vmul.f32 %v1257, 0.01
        %v1306 = vmul.f32 %v1258, 0.01
        %v1307 = vmul.f32 %v1259, 0.01
        %v1308 = vmul.f32 %v1260, 0.01
        %v1309 = vmul.f32 %v1261, 0.01
        %v1310 = vmul.f32 %v1262, 0.01
        %v1311 = vmul.f32 %v1263, 0.01
        %v1312 = vmul.f32 %v1264, 0.01
        %v1313 = vmul.f32 %v1265, 0.01
        %v1314 = vmul.f32 %v1266, 0.01
        %v1315 = vmul.f32 %v1267, 0.01
        %v1316 = vmul.f32 %v1268, 0.01
        %v1317 = vmul.f32 %v1269, 0.01
        %v1318 = vmul.f32 %v1270, 0.01
        %v1319 = vmul.f32 %v1271, 0.01
        %v1320 = vmul.f32 %v1272, 0.01
        %v1321 = vmul.f32 %v1273, 0.01
        %v1322 = vmul.f32 %v1274, 0.01
        %v1323 = vmul.f32 %v1275, 0.01
        %v1324 = vmul.f32 %v1276, 0.01
        %v1325 = vmul.f32 %v1277, 0.01
        %v1326 = vsel %vm1278, %v1254, %v1302
        %v1327 = vsel %vm1279, %v1255, %v1303
        %v1328 = vsel %vm1280, %v1256, %v1304
        %v1329 = vsel %vm1281, %v1257, %v1305
        %v1330 = vsel %vm1282, %v1258, %v1306
        %v1331 = vsel %vm1283, %v1259, %v1307
        %v1332 = vsel %vm1284, %v1260, %v1308
        %v1333 = vsel %vm1285, %v1261, %v1309
        %v1334 = vsel %vm1286, %v1262, %v1310
        %v1335 = vsel %vm1287, %v1263, %v1311
        %v1336 = vsel %vm1288, %v1264, %v1312
        %v1337 = vsel %vm1289, %v1265, %v1313
        %v1338 = vsel %vm1290, %v1266, %v1314
        %v1339 = vsel %vm1291, %v1267, %v1315
        %v1340 = vsel %vm1292, %v1268, %v1316
        %v1341 = vsel %vm1293, %v1269, %v1317
        %v1342 = vsel %vm1294, %v1270, %v1318
        %v1343 = vsel %vm1295, %v1271, %v1319
        %v1344 = vsel %vm1296, %v1272, %v1320
        %v1345 = vsel %vm1297, %v1273, %v1321
        %v1346 = vsel %vm1298, %v1274, %v1322
        %v1347 = vsel %vm1299, %v1275, %v1323
        %v1348 = vsel %vm1300, %v1276, %v1324
        %v1349 = vsel %vm1301, %v1277, %v1325
        %v1350 = vld [vmem:[%s278] sm:$0x3]
        %v1351 = vld [vmem:[%s278 + $0x2] sm:$0x3]
        %v1352 = vld [vmem:[%s278 + $0x4] sm:$0x3]
        %v1353 = vld [vmem:[%s278 + $0x6] sm:$0x3]
        %v1354 = vld [vmem:[%s278 + $0x8] sm:$0x3]
        %v1355 = vld [vmem:[%s278 + $0xa] sm:$0x3]
        %v1356 = vld [vmem:[%s278 + $0xc] sm:$0x3]
        %v1357 = vld [vmem:[%s278 + $0xe] sm:$0x3]
        %v1358 = vld [vmem:[%s278 + $0x10] sm:$0x3]
        %v1359 = vld [vmem:[%s278 + $0x12] sm:$0x3]
        %v1360 = vld [vmem:[%s278 + $0x14] sm:$0x3]
        %v1361 = vld [vmem:[%s278 + $0x16] sm:$0x3]
        %v1362 = vld [vmem:[%s278 + $0x18] sm:$0x3]
        %v1363 = vld [vmem:[%s278 + $0x1a] sm:$0x3]
        %v1364 = vld [vmem:[%s278 + $0x1c] sm:$0x3]
        %v1365 = vld [vmem:[%s278 + $0x1e] sm:$0x3]
        %v1366 = vld [vmem:[%s278 + $0x20] sm:$0x3]
        %v1367 = vld [vmem:[%s278 + $0x22] sm:$0x3]
        %v1368 = vld [vmem:[%s278 + $0x24] sm:$0x3]
        %v1369 = vld [vmem:[%s278 + $0x26] sm:$0x3]
        %v1370 = vld [vmem:[%s278 + $0x28] sm:$0x3]
        %v1371 = vld [vmem:[%s278 + $0x2a] sm:$0x3]
        %v1372 = vld [vmem:[%s278 + $0x2c] sm:$0x3]
        %v1373 = vld [vmem:[%s278 + $0x2e] sm:$0x3]
        %vm1374 = vnez %v1350
        %vm1375 = vnez %v1351
        %vm1376 = vnez %v1352
        %vm1377 = vnez %v1353
        %vm1378 = vnez %v1354
        %vm1379 = vnez %v1355
        %vm1380 = vnez %v1356
        %vm1381 = vnez %v1357
        %vm1382 = vnez %v1358
        %vm1383 = vnez %v1359
        %vm1384 = vnez %v1360
        %vm1385 = vnez %v1361
        %vm1386 = vnez %v1362
        %vm1387 = vnez %v1363
        %vm1388 = vnez %v1364
        %vm1389 = vnez %v1365
        %vm1390 = vnez %v1366
        %vm1391 = vnez %v1367
        %vm1392 = vnez %v1368
        %vm1393 = vnez %v1369
        %vm1394 = vnez %v1370
        %vm1395 = vnez %v1371
        %vm1396 = vnez %v1372
        %vm1397 = vnez %v1373
        %v1398 = vsel %vm1374, 16843009, 0
        %v1399 = vsel %vm1375, 16843009, 0
        %v1400 = vsel %vm1376, 16843009, 0
        %v1401 = vsel %vm1377, 16843009, 0
        %v1402 = vsel %vm1378, 16843009, 0
        %v1403 = vsel %vm1379, 16843009, 0
        %v1404 = vsel %vm1380, 16843009, 0
        %v1405 = vsel %vm1381, 16843009, 0
        %v1406 = vsel %vm1382, 16843009, 0
        %v1407 = vsel %vm1383, 16843009, 0
        %v1408 = vsel %vm1384, 16843009, 0
        %v1409 = vsel %vm1385, 16843009, 0
        %v1410 = vsel %vm1386, 16843009, 0
        %v1411 = vsel %vm1387, 16843009, 0
        %v1412 = vsel %vm1388, 16843009, 0
        %v1413 = vsel %vm1389, 16843009, 0
        %v1414 = vsel %vm1390, 16843009, 0
        %v1415 = vsel %vm1391, 16843009, 0
        %v1416 = vsel %vm1392, 16843009, 0
        %v1417 = vsel %vm1393, 16843009, 0
        %v1418 = vsel %vm1394, 16843009, 0
        %v1419 = vsel %vm1395, 16843009, 0
        %v1420 = vsel %vm1396, 16843009, 0
        %v1421 = vsel %vm1397, 16843009, 0
        %v1422 = vunpack.c.0.s8 %v1398
        %v1423 = vunpack.c.0.s8 %v1399
        %v1424 = vunpack.c.0.s8 %v1400
        %v1425 = vunpack.c.0.s8 %v1401
        %v1426 = vunpack.c.0.s8 %v1402
        %v1427 = vunpack.c.0.s8 %v1403
        %v1428 = vunpack.c.0.s8 %v1404
        %v1429 = vunpack.c.0.s8 %v1405
        %v1430 = vunpack.c.0.s8 %v1406
        %v1431 = vunpack.c.0.s8 %v1407
        %v1432 = vunpack.c.0.s8 %v1408
        %v1433 = vunpack.c.0.s8 %v1409
        %v1434 = vunpack.c.0.s8 %v1410
        %v1435 = vunpack.c.0.s8 %v1411
        %v1436 = vunpack.c.0.s8 %v1412
        %v1437 = vunpack.c.0.s8 %v1413
        %v1438 = vunpack.c.0.s8 %v1414
        %v1439 = vunpack.c.0.s8 %v1415
        %v1440 = vunpack.c.0.s8 %v1416
        %v1441 = vunpack.c.0.s8 %v1417
        %v1442 = vunpack.c.0.s8 %v1418
        %v1443 = vunpack.c.0.s8 %v1419
        %v1444 = vunpack.c.0.s8 %v1420
        %v1445 = vunpack.c.0.s8 %v1421
        %vm1446 = vcmp.ne.s32.totalorder %v1422, 0
        %vm1447 = vcmp.ne.s32.totalorder %v1423, 0
        %vm1448 = vcmp.ne.s32.totalorder %v1424, 0
        %vm1449 = vcmp.ne.s32.totalorder %v1425, 0
        %vm1450 = vcmp.ne.s32.totalorder %v1426, 0
        %vm1451 = vcmp.ne.s32.totalorder %v1427, 0
        %vm1452 = vcmp.ne.s32.totalorder %v1428, 0
        %vm1453 = vcmp.ne.s32.totalorder %v1429, 0
        %vm1454 = vcmp.ne.s32.totalorder %v1430, 0
        %vm1455 = vcmp.ne.s32.totalorder %v1431, 0
        %vm1456 = vcmp.ne.s32.totalorder %v1432, 0
        %vm1457 = vcmp.ne.s32.totalorder %v1433, 0
        %vm1458 = vcmp.ne.s32.totalorder %v1434, 0
        %vm1459 = vcmp.ne.s32.totalorder %v1435, 0
        %vm1460 = vcmp.ne.s32.totalorder %v1436, 0
        %vm1461 = vcmp.ne.s32.totalorder %v1437, 0
        %vm1462 = vcmp.ne.s32.totalorder %v1438, 0
        %vm1463 = vcmp.ne.s32.totalorder %v1439, 0
        %vm1464 = vcmp.ne.s32.totalorder %v1440, 0
        %vm1465 = vcmp.ne.s32.totalorder %v1441, 0
        %vm1466 = vcmp.ne.s32.totalorder %v1442, 0
        %vm1467 = vcmp.ne.s32.totalorder %v1443, 0
        %vm1468 = vcmp.ne.s32.totalorder %v1444, 0
        %vm1469 = vcmp.ne.s32.totalorder %v1445, 0
        %v1470 = vsel %vm1446, -3e+38, %v1326
        %v1471 = vsel %vm1447, -3e+38, %v1327
        %v1472 = vsel %vm1448, -3e+38, %v1328
        %v1473 = vsel %vm1449, -3e+38, %v1329
        %v1474 = vsel %vm1450, -3e+38, %v1330
        %v1475 = vsel %vm1451, -3e+38, %v1331
        %v1476 = vsel %vm1452, -3e+38, %v1332
        %v1477 = vsel %vm1453, -3e+38, %v1333
        %v1478 = vsel %vm1454, -3e+38, %v1334
        %v1479 = vsel %vm1455, -3e+38, %v1335
        %v1480 = vsel %vm1456, -3e+38, %v1336
        %v1481 = vsel %vm1457, -3e+38, %v1337
        %v1482 = vsel %vm1458, -3e+38, %v1338
        %v1483 = vsel %vm1459, -3e+38, %v1339
        %v1484 = vsel %vm1460, -3e+38, %v1340
        %v1485 = vsel %vm1461, -3e+38, %v1341
        %v1486 = vsel %vm1462, -3e+38, %v1342
        %v1487 = vsel %vm1463, -3e+38, %v1343
        %v1488 = vsel %vm1464, -3e+38, %v1344
        %v1489 = vsel %vm1465, -3e+38, %v1345
        %v1490 = vsel %vm1466, -3e+38, %v1346
        %v1491 = vsel %vm1467, -3e+38, %v1347
        %v1492 = vsel %vm1468, -3e+38, %v1348
        %v1493 = vsel %vm1469, -3e+38, %v1349
        %v1494 = vmax.f32 %v1470, %v1471
        %v1495 = vmax.f32 %v1494, %v1472
        %v1496 = vrot.slane %v1495, 4
        %v1497 = vmax.f32 %v1495, %v1496
        %v1498 = vrot.slane %v1497, 2
        %v1499 = vmax.f32 %v1497, %v1498
        %v1500 = vrot.slane %v1499, 1
        %v1501 = vmax.f32 %v1499, %v1500
        %v1502 = vmax.f32 %v1473, %v1474
        %v1503 = vmax.f32 %v1502, %v1475
        %v1504 = vrot.slane %v1503, 4
        %v1505 = vmax.f32 %v1503, %v1504
        %v1506 = vrot.slane %v1505, 2
        %v1507 = vmax.f32 %v1505, %v1506
        %v1508 = vrot.slane %v1507, 1
        %v1509 = vmax.f32 %v1507, %v1508
        %v1510 = vmax.f32 %v1476, %v1477
        %v1511 = vmax.f32 %v1510, %v1478
        %v1512 = vrot.slane %v1511, 4
        %v1513 = vmax.f32 %v1511, %v1512
        %v1514 = vrot.slane %v1513, 2
        %v1515 = vmax.f32 %v1513, %v1514
        %v1516 = vrot.slane %v1515, 1
        %v1517 = vmax.f32 %v1515, %v1516
        %v1518 = vmax.f32 %v1479, %v1480
        %v1519 = vmax.f32 %v1518, %v1481
        %v1520 = vrot.slane %v1519, 4
        %v1521 = vmax.f32 %v1519, %v1520
        %v1522 = vrot.slane %v1521, 2
        %v1523 = vmax.f32 %v1521, %v1522
        %v1524 = vrot.slane %v1523, 1
        %v1525 = vmax.f32 %v1523, %v1524
        %v1526 = vmax.f32 %v1482, %v1483
        %v1527 = vmax.f32 %v1526, %v1484
        %v1528 = vrot.slane %v1527, 4
        %v1529 = vmax.f32 %v1527, %v1528
        %v1530 = vrot.slane %v1529, 2
        %v1531 = vmax.f32 %v1529, %v1530
        %v1532 = vrot.slane %v1531, 1
        %v1533 = vmax.f32 %v1531, %v1532
        %v1534 = vmax.f32 %v1485, %v1486
        %v1535 = vmax.f32 %v1534, %v1487
        %v1536 = vrot.slane %v1535, 4
        %v1537 = vmax.f32 %v1535, %v1536
        %v1538 = vrot.slane %v1537, 2
        %v1539 = vmax.f32 %v1537, %v1538
        %v1540 = vrot.slane %v1539, 1
        %v1541 = vmax.f32 %v1539, %v1540
        %v1542 = vmax.f32 %v1488, %v1489
        %v1543 = vmax.f32 %v1542, %v1490
        %v1544 = vrot.slane %v1543, 4
        %v1545 = vmax.f32 %v1543, %v1544
        %v1546 = vrot.slane %v1545, 2
        %v1547 = vmax.f32 %v1545, %v1546
        %v1548 = vrot.slane %v1547, 1
        %v1549 = vmax.f32 %v1547, %v1548
        %v1550 = vmax.f32 %v1491, %v1492
        %v1551 = vmax.f32 %v1550, %v1493
        %v1552 = vrot.slane %v1551, 4
        %v1553 = vmax.f32 %v1551, %v1552
        %v1554 = vrot.slane %v1553, 2
        %v1555 = vmax.f32 %v1553, %v1554
        %v1556 = vrot.slane %v1555, 1
        %v1557 = vmax.f32 %v1555, %v1556
        %v1558 = vld [vmem:[%s4] sm:$0xff]
        %v1559 = vld [vmem:[%s4 + $0x8] sm:$0xff]
        %v1560 = vld [vmem:[%s4 + $0x10] sm:$0xff]
        %v1561 = vld [vmem:[%s4 + $0x18] sm:$0xff]
        %v1562 = vld [vmem:[%s4 + $0x20] sm:$0xff]
        %v1563 = vld [vmem:[%s4 + $0x28] sm:$0xff]
        %v1564 = vld [vmem:[%s4 + $0x30] sm:$0xff]
        %v1565 = vld [vmem:[%s4 + $0x38] sm:$0xff]
        %v1566 = vld [vmem:[%s4 + $0x40] sm:$0xff]
        %v1567 = vld [vmem:[%s4 + $0x48] sm:$0xff]
        %v1568 = vld [vmem:[%s4 + $0x50] sm:$0xff]
        %v1569 = vld [vmem:[%s4 + $0x58] sm:$0xff]
        %v1570 = vld [vmem:[%s4 + $0x60] sm:$0xff]
        %v1571 = vld [vmem:[%s4 + $0x68] sm:$0xff]
        %v1572 = vld [vmem:[%s4 + $0x70] sm:$0xff]
        %v1573 = vld [vmem:[%s4 + $0x78] sm:$0xff]
        %v1574 = vld [vmem:[%s5] sm:$0x1]
        %v1576 = vlaneseq
        %v1577 = vshrl.u32 %v1576, 7
        %v1578 = vsub.s32 0, %v1577
        %v1579 = vrot.slane %v1574, %v1578
        %vm1589 = vcmask 1041409
        %v1590 = vsel %vm1589, %v1509, %v1501
        %vm1591 = vcmask 1042434
        %v1592 = vsel %vm1591, %v1517, %v1590
        %vm1593 = vcmask 1043459
        %v1594 = vsel %vm1593, %v1525, %v1592
        %vm1595 = vcmask 1044484
        %v1596 = vsel %vm1595, %v1533, %v1594
        %vm1597 = vcmask 1045509
        %v1598 = vsel %vm1597, %v1541, %v1596
        %vm1599 = vcmask 1046534
        %v1600 = vsel %vm1599, %v1549, %v1598
        %vm1601 = vcmask 1047559
        %v1602 = vsel %vm1601, %v1557, %v1600
        %1604 = vmatprep.subr.mxu0 0.0
        %1605 = vmatpush1.msra.mxu0 %v1573
        %1606 = vmatprep.subr.mxu0 0.0
        %1607 = vmatpush1.msra.mxu0 %v1572
        %1608 = vmatprep.subr.mxu0 0.0
        %1609 = vmatpush1.msra.mxu0 %v1571
        %1610 = vmatprep.subr.mxu0 0.0
        %1611 = vmatpush1.msra.mxu0 %v1570
        %1612 = vmatprep.subr.mxu0 0.0
        %1613 = vmatpush1.msra.mxu0 %v1569
        %1614 = vmatprep.subr.mxu0 0.0
        %1615 = vmatpush1.msra.mxu0 %v1568
        %1616 = vmatprep.subr.mxu0 0.0
        %1617 = vmatpush1.msra.mxu0 %v1567
        %1618 = vmatprep.subr.mxu0 0.0
        %1619 = vmatpush1.msra.mxu0 %v1566
        %1620 = vmatprep.subr.mxu0 0.0
        %1621 = vmatpush1.msra.mxu0 %v1565
        %1622 = vmatprep.subr.mxu0 0.0
        %1623 = vmatpush1.msra.mxu0 %v1564
        %1624 = vmatprep.subr.mxu0 0.0
        %1625 = vmatpush1.msra.mxu0 %v1563
        %1626 = vmatprep.subr.mxu0 0.0
        %1627 = vmatpush1.msra.mxu0 %v1562
        %1628 = vmatprep.subr.mxu0 0.0
        %1629 = vmatpush1.msra.mxu0 %v1561
        %1630 = vmatprep.subr.mxu0 0.0
        %1631 = vmatpush1.msra.mxu0 %v1560
        %1632 = vmatprep.subr.mxu0 0.0
        %1633 = vmatpush1.msra.mxu0 %v1559
        %1634 = vmatprep.subr.mxu0 0.0
        %1635 = vmatpush1.msra.mxu0 %v1558
        %1636 = vmatprep.subr.mxu0 0.0
        %1637 = vmatpush2.msra.mxu0 0.0
        %1638 = vmatprep.subr.mxu0 0.0
        %1639 = vmatpush2.msra.mxu0 0.0
        %1640 = vmatprep.subr.mxu0 0.0
        %1641 = vmatpush2.msra.mxu0 0.0
        %1642 = vmatprep.subr.mxu0 0.0
        %1643 = vmatpush2.msra.mxu0 0.0
        %1644 = vmatprep.subr.mxu0 0.0
        %1645 = vmatpush2.msra.mxu0 0.0
        %1646 = vmatprep.subr.mxu0 0.0
        %1647 = vmatpush2.msra.mxu0 0.0
        %1648 = vmatprep.subr.mxu0 0.0
        %1649 = vmatpush2.msra.mxu0 0.0
        %1650 = vmatprep.subr.mxu0 0.0
        %1651 = vmatpush2.msra.mxu0 0.0
        %1652 = vmatprep.subr.mxu0 0.0
        %1653 = vmatpush2.msra.mxu0 0.0
        %1654 = vmatprep.subr.mxu0 0.0
        %1655 = vmatpush2.msra.mxu0 0.0
        %1656 = vmatprep.subr.mxu0 0.0
        %1657 = vmatpush2.msra.mxu0 0.0
        %1658 = vmatprep.subr.mxu0 0.0
        %1659 = vmatpush2.msra.mxu0 0.0
        %1660 = vmatprep.subr.mxu0 0.0
        %1661 = vmatpush2.msra.mxu0 0.0
        %1662 = vmatprep.subr.mxu0 0.0
        %1663 = vmatpush2.msra.mxu0 0.0
        %1664 = vmatprep.subr.mxu0 0.0
        %1665 = vmatpush2.msra.mxu0 0.0
        %1666 = vmatprep.subr.mxu0 0.0
        %1667 = vmatpush2.msra.mxu0 0.0
        %1668 = vmatprep.mubr.f32.mxu0 0.0
        %1669 = vmatmul.mubr.f32.gmra.mxu0 %v1602
        %v1670 = vpop.f32.mrf.mxu0
        %v1671 = vadd.f32 %v1579, %v1670
        %v1672 = vpop.f32.mrf.mxu0
        %1673 = vdwg.mxu0
        %1674 = vst [vmem:[%s265] sm:$0xff] %v1671
        %s1675 = sand.u32 %s164, 1
        %s1676 = scalar_lea.sflag [#allocation4], %s1675
        %s1677 = sand.u32 %s164, 1
        %s1678 = smul.addr %s1677, 8
        %s1679 = scalar_lea.vmem [#allocation3], %s1678
        // Predicated region
        $region45: #{cnn_forward.1} parent=43 // pred_check
          %p1680 = pneg %p174
        $region46: #{cnn_forward.1} parent=43 // pred_check_branch
          %1682 = sbr.rel (%p1680) target = $region48
        $region47: #{cnn_forward.1} parent=43 // pred_region
          %s1684 = ssub.s32 128, 128
          %1685 = vsyncadd %s1676, %s1684
          %s1686 = smul.addr %s20, 128
          %s1687 = scalar_lea.hbm %s6, %s1686
          %s1689 = sshll.u32 %s1679, 4
          %s1690 = int_to_ptr.vmem [resolvable:$true] %s1689
          %1692 = dma.vmem_to_hbm [thread:$0]  %s1690, 128, %s1687, %s1676
        $region48: #{cnn_forward.1} parent=43 // pred_fallthru
          _
      $region44: #{cnn_forward.1} parent=5 // pred_fallthru
        _
      %p1693 = scmp.le.s32.totalorder 2, %s15
      // Predicated region
      $region49: #{cnn_forward.1} parent=5 // pred_check
        %p1694 = pneg %p1693
      $region50: #{cnn_forward.1} parent=5 // pred_check_branch
        %1696 = sbr.rel (%p1694) target = $region52
      $region51: #{cnn_forward.1} parent=5 // pred_region
        %s1697 = ssub.s32 %s15, 2
        // Predicated region
        $region53: #{cnn_forward.1} parent=51 // pred_check
          %p1698 = pneg %p180
        $region54: #{cnn_forward.1} parent=51 // pred_check_branch
          %1700 = sbr.rel (%p1698) target = $region56
        $region55: #{cnn_forward.1} parent=51 // pred_region
          %s1701 = sand.u32 %s165, 1
          %s1702 = scalar_lea.sflag [#allocation4], %s1701
          %s1703 = sand.u32 %s165, 1
          %s1704 = smul.addr %s1703, 8
          %s1705 = scalar_lea.vmem [#allocation3], %s1704
          %1706 = dma.done %s1702, 128
        $region56: #{cnn_forward.1} parent=51 // pred_fallthru
          _
      $region52: #{cnn_forward.1} parent=5 // pred_fallthru
        _
    $region6: #{cnn_forward.1} parent=1 // loop_footer
      %s19 = sadd.s32 1, %s15
    $region7: #{cnn_forward.1} parent=1 // loop_footer_branch
      %14 = sbr.rel target = $region3
    $region8: #{cnn_forward.1} parent=1 // loop_exit
      _
    %1707 = vsyncpa [#allocation4], 1
    %s1708 = scalar_lea.sflag [#allocation4], 1
    %1709 = vsyncpa %s1708, 1

</llo_original>
